<compile_context>
chip_gen: v5e
topology: v5e:2x2
jax: 0.10.0
libtpu: 0.0.40
codegen_flags: <defaults>
</compile_context>

<pallas_src>
import math

import jax
import jax.numpy as jnp
from jax.experimental import pallas as pl
from jax.experimental.pallas import tpu as pltpu


def _length_kernel(x_ref, o_ref):
    # x_ref: (TM, D) rows of the flattened input.
    # o_ref: (TM // 128, 128) lane-dense slab of per-row L2 norms.
    slabs, lanes = o_ref.shape
    d = x_ref.shape[-1]
    x = x_ref[...].astype(jnp.float32)
    # Free reshape (splits the sublane/row axis only) so the reduced result
    # comes out with 128 norms per vreg row -> lane-dense, unmasked stores.
    x3 = x.reshape(slabs, lanes, d)
    ss = jnp.sum(x3 * x3, axis=-1)               # (slabs, 128), f32 accumulate
    o_ref[...] = jnp.sqrt(ss).astype(o_ref.dtype)


def length(inputs: jax.Array, *, block_bytes: int = 2 * 1024 * 1024) -> jax.Array:
    """L2 norm over the last axis, matching torch.sqrt(torch.sum(x**2, -1))."""
    *lead, d = inputs.shape
    m = math.prod(lead) if lead else 1
    x2d = inputs.reshape(m, d)                   # free reshape, no HBM copy

    itemsize = jnp.dtype(inputs.dtype).itemsize
    sub = max(8, 32 // itemsize)                 # sublane multiple: 8 f32 / 16 bf16 / 32 int8
    row_quantum = 128 * sub                      # keeps the (TM//128, 128) out-block legal

    # Rows per grid step: ~block_bytes of input, a multiple of row_quantum,
    # but never (much) more than the whole problem (tiny inputs -> grid=(1,)).
    tm = (block_bytes // max(1, d * itemsize)) // row_quantum * row_quantum
    tm = max(row_quantum, tm)
    tm = min(tm, pl.cdiv(m, row_quantum) * row_quantum)

    num_blocks = pl.cdiv(m, tm)                  # last block may overhang; no input padding
    slabs = tm // 128
    out_rows = num_blocks * slabs                # tiny over-allocation of the OUTPUT only

    out = pl.pallas_call(
        _length_kernel,
        out_shape=jax.ShapeDtypeStruct((out_rows, 128), inputs.dtype),
        grid_spec=pltpu.PrefetchScalarGridSpec(
            num_scalar_prefetch=0,
            grid=(num_blocks,),
            in_specs=[pl.BlockSpec((tm, d), lambda i: (i, 0))],
            out_specs=pl.BlockSpec((slabs, 128), lambda i: (i, 0)),
        ),
        compiler_params=pltpu.CompilerParams(
            dimension_semantics=("parallel",),   # independent blocks -> shard across TCs
            vmem_limit_bytes=32 * 1024 * 1024,   # safe on v5e/v6e/v7x; covers 2 MiB blocks
        ),
    )(x2d)

    # Norm rows past m (overhang of the ragged last block) are garbage; drop them.
    return out.reshape(-1)[:m].reshape(tuple(lead))


if __name__ == "__main__":
    key = jax.random.PRNGKey(0)
    # Typical CapsNet "Length" input: (batch, num_capsules, capsule_dim)
    batch, num_caps, caps_dim = 2, 10, 16
    x = jax.random.normal(key, (batch, num_caps, caps_dim), dtype=jnp.float32)

    y = jax.block_until_ready(length(x))
    y_ref = jnp.sqrt(jnp.sum(jnp.square(x), axis=-1))
    assert y.shape == (batch, num_caps), y.shape
    assert jnp.allclose(y, y_ref, atol=1e-5, rtol=1e-5)

    # Ragged row count (M not a multiple of the row tile) — exercises the
    # overhanging last block without any wrapper-side input padding.
    x2 = jax.random.normal(jax.random.PRNGKey(1), (3, 37, 16), dtype=jnp.float32)
    y2 = jax.block_until_ready(length(x2))
    y2_ref = jnp.sqrt(jnp.sum(jnp.square(x2), axis=-1))
    assert y2.shape == (3, 37), y2.shape
    assert jnp.allclose(y2, y2_ref, atol=1e-5, rtol=1e-5)

    print("KERNEL_OK")
</pallas_src>

<mosaic_0001>
module attributes {stable_mosaic.version = 11 : i64} {
  func.func @_length_kernel(%arg0: i32, %arg1: memref<1024x16xf32, #tpu.memory_space<vmem>>, %arg2: memref<8x128xf32, #tpu.memory_space<vmem>>) attributes {dimension_semantics = [#tpu.dimension_semantics<parallel>], iteration_bounds = array<i64: 1>, scalar_prefetch = 0 : i64, scratch_operands = 0 : i64, tpu.core_type = #tpu.core_type<tc>, window_params = [{transform_indices = @transform_0, window_bounds = array<i64: 1024, 16>}, {transform_indices = @transform_1, window_bounds = array<i64: 8, 128>}]} {
    %c0 = arith.constant 0 : index
    %c0_0 = arith.constant 0 : index
    %0 = vector.load %arg1[%c0, %c0_0] : memref<1024x16xf32, #tpu.memory_space<vmem>>, vector<1024x16xf32>
    %1 = vector.shape_cast %0 : vector<1024x16xf32> to vector<8x128x16xf32>
    %2 = arith.mulf %1, %1 : vector<8x128x16xf32>
    %cst = arith.constant dense<0.000000e+00> : vector<8x128xf32>
    %3 = vector.multi_reduction <add>, %2, %cst [2] : vector<8x128x16xf32> to vector<8x128xf32>
    %4 = math.sqrt %3 : vector<8x128xf32>
    %c0_1 = arith.constant 0 : index
    %c0_2 = arith.constant 0 : index
    %5 = vector.load %arg2[%c0_1, %c0_2] : memref<8x128xf32, #tpu.memory_space<vmem>>, vector<8x128xf32>
    tpu.vector_store %arg2[%c0_1, %c0_2], %4 {strides = array<i32>} : memref<8x128xf32, #tpu.memory_space<vmem>>, vector<8x128xf32>,
    return
  }
  func.func @transform_0(%arg0: i32) -> (i32, i32) {
    %c0_i32 = arith.constant 0 : i32
    %c0_i32_0 = arith.constant 0 : i32
    return %arg0, %c0_i32 : i32, i32
  }
  func.func @transform_1(%arg0: i32) -> (i32, i32) {
    %c0_i32 = arith.constant 0 : i32
    %c0_i32_0 = arith.constant 0 : i32
    return %arg0, %c0_i32 : i32, i32
  }
}

</mosaic_0001>

<llo_original>
// kernel: tpu_custom_call.1
$region0: #{tpu_custom_call.1}
  #allocation0 [shape = 'u32[]', space=smem, size = 0x4, offset = 0x4, fixed_abs, tag = 'smem constant byte address 0x4 - core index']
  #allocation1 [shape = 'u32[72,128]{1,0:T(1,128)}', space=vmem, size = 0x9000, scoped, tag = 'internal scratch']
  %s0 = inlined_call_operand.vmem [shape: f32[20,16], index: 0, kind: input, shape index: {}]
  %s1 = inlined_call_operand.hbm [shape: f32[8,128], index: 1, kind: output, shape index: {}]
  %s2 = sld [smem:[#allocation0]]
  $region14: #{tpu_custom_call.1} parent=0
    _
  %s4 = ssub.s32 1, %s2
  %s5 = scalar_select 0, %s4, %s2
  $region1: #{tpu_custom_call.1} parent=0
    #allocation2 [shape = 'u8[4096]{0}', space=vmem, size = 0x1000, scoped, tag = 'output window, operand 0, single buffered']
    #allocation3 [shape = 's32[1]{0}', space=sflag, size = 0x4, scoped, tag = 'scoped memory for tpu_custom_call.1']
    %6 = vsyncpa [#allocation3], 0
    // Predicated region
    $region2: #{tpu_custom_call.1} parent=1 // pred_check
      _
    $region3: #{tpu_custom_call.1} parent=1 // pred_check_branch
      %8 = sbr.rel (0) target = $region5
    $region4: #{tpu_custom_call.1} parent=1 // pred_region
      _
    $region5: #{tpu_custom_call.1} parent=1 // pred_fallthru
      _
    %v9 = vld [vmem:[%s0] sm:$0xff]
    %v10 = vld [vmem:[%s0 + $0x8] sm:$0xff]
    %v11 = vld [vmem:[%s0 + $0x10] sm:$0xff]
    %v12 = vld [vmem:[%s0 + $0x18] sm:$0xff]
    %v13 = vld [vmem:[%s0 + $0x20] sm:$0xff]
    %v14 = vld [vmem:[%s0 + $0x28] sm:$0xff]
    %v15 = vld [vmem:[%s0 + $0x30] sm:$0xff]
    %v16 = vld [vmem:[%s0 + $0x38] sm:$0xff]
    %v17 = vld [vmem:[%s0 + $0x40] sm:$0xff]
    %v18 = vld [vmem:[%s0 + $0x48] sm:$0xff]
    %v19 = vld [vmem:[%s0 + $0x50] sm:$0xff]
    %v20 = vld [vmem:[%s0 + $0x58] sm:$0xff]
    %v21 = vld [vmem:[%s0 + $0x60] sm:$0xff]
    %v22 = vld [vmem:[%s0 + $0x68] sm:$0xff]
    %v23 = vld [vmem:[%s0 + $0x70] sm:$0xff]
    %v24 = vld [vmem:[%s0 + $0x78] sm:$0xff]
    %v25 = vld [vmem:[%s0 + $0x80] sm:$0xff]
    %v26 = vld [vmem:[%s0 + $0x88] sm:$0xff]
    %v27 = vld [vmem:[%s0 + $0x90] sm:$0xff]
    %v28 = vld [vmem:[%s0 + $0x98] sm:$0xff]
    %v29 = vld [vmem:[%s0 + $0xa0] sm:$0xff]
    %v30 = vld [vmem:[%s0 + $0xa8] sm:$0xff]
    %v31 = vld [vmem:[%s0 + $0xb0] sm:$0xff]
    %v32 = vld [vmem:[%s0 + $0xb8] sm:$0xff]
    %v33 = vld [vmem:[%s0 + $0xc0] sm:$0xff]
    %v34 = vld [vmem:[%s0 + $0xc8] sm:$0xff]
    %v35 = vld [vmem:[%s0 + $0xd0] sm:$0xff]
    %v36 = vld [vmem:[%s0 + $0xd8] sm:$0xff]
    %v37 = vld [vmem:[%s0 + $0xe0] sm:$0xff]
    %v38 = vld [vmem:[%s0 + $0xe8] sm:$0xff]
    %v39 = vld [vmem:[%s0 + $0xf0] sm:$0xff]
    %v40 = vld [vmem:[%s0 + $0xf8] sm:$0xff]
    %v41 = vld [vmem:[%s0 + $0x100] sm:$0xff]
    %v42 = vld [vmem:[%s0 + $0x108] sm:$0xff]
    %v43 = vld [vmem:[%s0 + $0x110] sm:$0xff]
    %v44 = vld [vmem:[%s0 + $0x118] sm:$0xff]
    %v45 = vld [vmem:[%s0 + $0x120] sm:$0xff]
    %v46 = vld [vmem:[%s0 + $0x128] sm:$0xff]
    %v47 = vld [vmem:[%s0 + $0x130] sm:$0xff]
    %v48 = vld [vmem:[%s0 + $0x138] sm:$0xff]
    %v49 = vld [vmem:[%s0 + $0x140] sm:$0xff]
    %v50 = vld [vmem:[%s0 + $0x148] sm:$0xff]
    %v51 = vld [vmem:[%s0 + $0x150] sm:$0xff]
    %v52 = vld [vmem:[%s0 + $0x158] sm:$0xff]
    %v53 = vld [vmem:[%s0 + $0x160] sm:$0xff]
    %v54 = vld [vmem:[%s0 + $0x168] sm:$0xff]
    %v55 = vld [vmem:[%s0 + $0x170] sm:$0xff]
    %v56 = vld [vmem:[%s0 + $0x178] sm:$0xff]
    %v57 = vld [vmem:[%s0 + $0x180] sm:$0xff]
    %v58 = vld [vmem:[%s0 + $0x188] sm:$0xff]
    %v59 = vld [vmem:[%s0 + $0x190] sm:$0xff]
    %v60 = vld [vmem:[%s0 + $0x198] sm:$0xff]
    %v61 = vld [vmem:[%s0 + $0x1a0] sm:$0xff]
    %v62 = vld [vmem:[%s0 + $0x1a8] sm:$0xff]
    %v63 = vld [vmem:[%s0 + $0x1b0] sm:$0xff]
    %v64 = vld [vmem:[%s0 + $0x1b8] sm:$0xff]
    %v65 = vld [vmem:[%s0 + $0x1c0] sm:$0xff]
    %v66 = vld [vmem:[%s0 + $0x1c8] sm:$0xff]
    %v67 = vld [vmem:[%s0 + $0x1d0] sm:$0xff]
    %v68 = vld [vmem:[%s0 + $0x1d8] sm:$0xff]
    %v69 = vld [vmem:[%s0 + $0x1e0] sm:$0xff]
    %v70 = vld [vmem:[%s0 + $0x1e8] sm:$0xff]
    %v71 = vld [vmem:[%s0 + $0x1f0] sm:$0xff]
    %v72 = vld [vmem:[%s0 + $0x1f8] sm:$0xff]
    %v73 = vld [vmem:[%s0 + $0x200] sm:$0xff]
    %v74 = vld [vmem:[%s0 + $0x208] sm:$0xff]
    %v75 = vld [vmem:[%s0 + $0x210] sm:$0xff]
    %v76 = vld [vmem:[%s0 + $0x218] sm:$0xff]
    %v77 = vld [vmem:[%s0 + $0x220] sm:$0xff]
    %v78 = vld [vmem:[%s0 + $0x228] sm:$0xff]
    %v79 = vld [vmem:[%s0 + $0x230] sm:$0xff]
    %v80 = vld [vmem:[%s0 + $0x238] sm:$0xff]
    %v81 = vld [vmem:[%s0 + $0x240] sm:$0xff]
    %v82 = vld [vmem:[%s0 + $0x248] sm:$0xff]
    %v83 = vld [vmem:[%s0 + $0x250] sm:$0xff]
    %v84 = vld [vmem:[%s0 + $0x258] sm:$0xff]
    %v85 = vld [vmem:[%s0 + $0x260] sm:$0xff]
    %v86 = vld [vmem:[%s0 + $0x268] sm:$0xff]
    %v87 = vld [vmem:[%s0 + $0x270] sm:$0xff]
    %v88 = vld [vmem:[%s0 + $0x278] sm:$0xff]
    %v89 = vld [vmem:[%s0 + $0x280] sm:$0xff]
    %v90 = vld [vmem:[%s0 + $0x288] sm:$0xff]
    %v91 = vld [vmem:[%s0 + $0x290] sm:$0xff]
    %v92 = vld [vmem:[%s0 + $0x298] sm:$0xff]
    %v93 = vld [vmem:[%s0 + $0x2a0] sm:$0xff]
    %v94 = vld [vmem:[%s0 + $0x2a8] sm:$0xff]
    %v95 = vld [vmem:[%s0 + $0x2b0] sm:$0xff]
    %v96 = vld [vmem:[%s0 + $0x2b8] sm:$0xff]
    %v97 = vld [vmem:[%s0 + $0x2c0] sm:$0xff]
    %v98 = vld [vmem:[%s0 + $0x2c8] sm:$0xff]
    %v99 = vld [vmem:[%s0 + $0x2d0] sm:$0xff]
    %v100 = vld [vmem:[%s0 + $0x2d8] sm:$0xff]
    %v101 = vld [vmem:[%s0 + $0x2e0] sm:$0xff]
    %v102 = vld [vmem:[%s0 + $0x2e8] sm:$0xff]
    %v103 = vld [vmem:[%s0 + $0x2f0] sm:$0xff]
    %v104 = vld [vmem:[%s0 + $0x2f8] sm:$0xff]
    %v105 = vld [vmem:[%s0 + $0x300] sm:$0xff]
    %v106 = vld [vmem:[%s0 + $0x308] sm:$0xff]
    %v107 = vld [vmem:[%s0 + $0x310] sm:$0xff]
    %v108 = vld [vmem:[%s0 + $0x318] sm:$0xff]
    %v109 = vld [vmem:[%s0 + $0x320] sm:$0xff]
    %v110 = vld [vmem:[%s0 + $0x328] sm:$0xff]
    %v111 = vld [vmem:[%s0 + $0x330] sm:$0xff]
    %v112 = vld [vmem:[%s0 + $0x338] sm:$0xff]
    %v113 = vld [vmem:[%s0 + $0x340] sm:$0xff]
    %v114 = vld [vmem:[%s0 + $0x348] sm:$0xff]
    %v115 = vld [vmem:[%s0 + $0x350] sm:$0xff]
    %v116 = vld [vmem:[%s0 + $0x358] sm:$0xff]
    %v117 = vld [vmem:[%s0 + $0x360] sm:$0xff]
    %v118 = vld [vmem:[%s0 + $0x368] sm:$0xff]
    %v119 = vld [vmem:[%s0 + $0x370] sm:$0xff]
    %v120 = vld [vmem:[%s0 + $0x378] sm:$0xff]
    %v121 = vld [vmem:[%s0 + $0x380] sm:$0xff]
    %v122 = vld [vmem:[%s0 + $0x388] sm:$0xff]
    %v123 = vld [vmem:[%s0 + $0x390] sm:$0xff]
    %v124 = vld [vmem:[%s0 + $0x398] sm:$0xff]
    %v125 = vld [vmem:[%s0 + $0x3a0] sm:$0xff]
    %v126 = vld [vmem:[%s0 + $0x3a8] sm:$0xff]
    %v127 = vld [vmem:[%s0 + $0x3b0] sm:$0xff]
    %v128 = vld [vmem:[%s0 + $0x3b8] sm:$0xff]
    %v129 = vld [vmem:[%s0 + $0x3c0] sm:$0xff]
    %v130 = vld [vmem:[%s0 + $0x3c8] sm:$0xff]
    %v131 = vld [vmem:[%s0 + $0x3d0] sm:$0xff]
    %v132 = vld [vmem:[%s0 + $0x3d8] sm:$0xff]
    %v133 = vld [vmem:[%s0 + $0x3e0] sm:$0xff]
    %v134 = vld [vmem:[%s0 + $0x3e8] sm:$0xff]
    %v135 = vld [vmem:[%s0 + $0x3f0] sm:$0xff]
    %v136 = vld [vmem:[%s0 + $0x3f8] sm:$0xff]
    %v137 = vmul.f32 %v9, %v9
    %v138 = vmul.f32 %v10, %v10
    %v139 = vmul.f32 %v11, %v11
    %v140 = vmul.f32 %v12, %v12
    %v141 = vmul.f32 %v13, %v13
    %v142 = vmul.f32 %v14, %v14
    %v143 = vmul.f32 %v15, %v15
    %v144 = vmul.f32 %v16, %v16
    %v145 = vmul.f32 %v17, %v17
    %v146 = vmul.f32 %v18, %v18
    %v147 = vmul.f32 %v19, %v19
    %v148 = vmul.f32 %v20, %v20
    %v149 = vmul.f32 %v21, %v21
    %v150 = vmul.f32 %v22, %v22
    %v151 = vmul.f32 %v23, %v23
    %v152 = vmul.f32 %v24, %v24
    %v153 = vmul.f32 %v25, %v25
    %v154 = vmul.f32 %v26, %v26
    %v155 = vmul.f32 %v27, %v27
    %v156 = vmul.f32 %v28, %v28
    %v157 = vmul.f32 %v29, %v29
    %v158 = vmul.f32 %v30, %v30
    %v159 = vmul.f32 %v31, %v31
    %v160 = vmul.f32 %v32, %v32
    %v161 = vmul.f32 %v33, %v33
    %v162 = vmul.f32 %v34, %v34
    %v163 = vmul.f32 %v35, %v35
    %v164 = vmul.f32 %v36, %v36
    %v165 = vmul.f32 %v37, %v37
    %v166 = vmul.f32 %v38, %v38
    %v167 = vmul.f32 %v39, %v39
    %v168 = vmul.f32 %v40, %v40
    %v169 = vmul.f32 %v41, %v41
    %v170 = vmul.f32 %v42, %v42
    %v171 = vmul.f32 %v43, %v43
    %v172 = vmul.f32 %v44, %v44
    %v173 = vmul.f32 %v45, %v45
    %v174 = vmul.f32 %v46, %v46
    %v175 = vmul.f32 %v47, %v47
    %v176 = vmul.f32 %v48, %v48
    %v177 = vmul.f32 %v49, %v49
    %v178 = vmul.f32 %v50, %v50
    %v179 = vmul.f32 %v51, %v51
    %v180 = vmul.f32 %v52, %v52
    %v181 = vmul.f32 %v53, %v53
    %v182 = vmul.f32 %v54, %v54
    %v183 = vmul.f32 %v55, %v55
    %v184 = vmul.f32 %v56, %v56
    %v185 = vmul.f32 %v57, %v57
    %v186 = vmul.f32 %v58, %v58
    %v187 = vmul.f32 %v59, %v59
    %v188 = vmul.f32 %v60, %v60
    %v189 = vmul.f32 %v61, %v61
    %v190 = vmul.f32 %v62, %v62
    %v191 = vmul.f32 %v63, %v63
    %v192 = vmul.f32 %v64, %v64
    %v193 = vmul.f32 %v65, %v65
    %v194 = vmul.f32 %v66, %v66
    %v195 = vmul.f32 %v67, %v67
    %v196 = vmul.f32 %v68, %v68
    %v197 = vmul.f32 %v69, %v69
    %v198 = vmul.f32 %v70, %v70
    %v199 = vmul.f32 %v71, %v71
    %v200 = vmul.f32 %v72, %v72
    %v201 = vmul.f32 %v73, %v73
    %v202 = vmul.f32 %v74, %v74
    %v203 = vmul.f32 %v75, %v75
    %v204 = vmul.f32 %v76, %v76
    %v205 = vmul.f32 %v77, %v77
    %v206 = vmul.f32 %v78, %v78
    %v207 = vmul.f32 %v79, %v79
    %v208 = vmul.f32 %v80, %v80
    %v209 = vmul.f32 %v81, %v81
    %v210 = vmul.f32 %v82, %v82
    %v211 = vmul.f32 %v83, %v83
    %v212 = vmul.f32 %v84, %v84
    %v213 = vmul.f32 %v85, %v85
    %v214 = vmul.f32 %v86, %v86
    %v215 = vmul.f32 %v87, %v87
    %v216 = vmul.f32 %v88, %v88
    %v217 = vmul.f32 %v89, %v89
    %v218 = vmul.f32 %v90, %v90
    %v219 = vmul.f32 %v91, %v91
    %v220 = vmul.f32 %v92, %v92
    %v221 = vmul.f32 %v93, %v93
    %v222 = vmul.f32 %v94, %v94
    %v223 = vmul.f32 %v95, %v95
    %v224 = vmul.f32 %v96, %v96
    %v225 = vmul.f32 %v97, %v97
    %v226 = vmul.f32 %v98, %v98
    %v227 = vmul.f32 %v99, %v99
    %v228 = vmul.f32 %v100, %v100
    %v229 = vmul.f32 %v101, %v101
    %v230 = vmul.f32 %v102, %v102
    %v231 = vmul.f32 %v103, %v103
    %v232 = vmul.f32 %v104, %v104
    %v233 = vmul.f32 %v105, %v105
    %v234 = vmul.f32 %v106, %v106
    %v235 = vmul.f32 %v107, %v107
    %v236 = vmul.f32 %v108, %v108
    %v237 = vmul.f32 %v109, %v109
    %v238 = vmul.f32 %v110, %v110
    %v239 = vmul.f32 %v111, %v111
    %v240 = vmul.f32 %v112, %v112
    %v241 = vmul.f32 %v113, %v113
    %v242 = vmul.f32 %v114, %v114
    %v243 = vmul.f32 %v115, %v115
    %v244 = vmul.f32 %v116, %v116
    %v245 = vmul.f32 %v117, %v117
    %v246 = vmul.f32 %v118, %v118
    %v247 = vmul.f32 %v119, %v119
    %v248 = vmul.f32 %v120, %v120
    %v249 = vmul.f32 %v121, %v121
    %v250 = vmul.f32 %v122, %v122
    %v251 = vmul.f32 %v123, %v123
    %v252 = vmul.f32 %v124, %v124
    %v253 = vmul.f32 %v125, %v125
    %v254 = vmul.f32 %v126, %v126
    %v255 = vmul.f32 %v127, %v127
    %v256 = vmul.f32 %v128, %v128
    %v257 = vmul.f32 %v129, %v129
    %v258 = vmul.f32 %v130, %v130
    %v259 = vmul.f32 %v131, %v131
    %v260 = vmul.f32 %v132, %v132
    %v261 = vmul.f32 %v133, %v133
    %v262 = vmul.f32 %v134, %v134
    %v263 = vmul.f32 %v135, %v135
    %v264 = vmul.f32 %v136, %v136
    %vm265 = vcmask 130048
    %v266 = vsel %vm265, %v137, 0.0
    %267 = vadd.xlane.f32.xlu0 %v266
    %v268 = vpop.xlane.xlu0 %267
    %v269 = vsel %vm265, %v138, 0.0
    %270 = vadd.xlane.f32.xlu0 %v269
    %v271 = vpop.xlane.xlu0 %270
    %v272 = vsel %vm265, %v139, 0.0
    %273 = vadd.xlane.f32.xlu0 %v272
    %v274 = vpop.xlane.xlu0 %273
    %v275 = vsel %vm265, %v140, 0.0
    %276 = vadd.xlane.f32.xlu0 %v275
    %v277 = vpop.xlane.xlu0 %276
    %v278 = vsel %vm265, %v141, 0.0
    %279 = vadd.xlane.f32.xlu0 %v278
    %v280 = vpop.xlane.xlu0 %279
    %v281 = vsel %vm265, %v142, 0.0
    %282 = vadd.xlane.f32.xlu0 %v281
    %v283 = vpop.xlane.xlu0 %282
    %v284 = vsel %vm265, %v143, 0.0
    %285 = vadd.xlane.f32.xlu0 %v284
    %v286 = vpop.xlane.xlu0 %285
    %v287 = vsel %vm265, %v144, 0.0
    %288 = vadd.xlane.f32.xlu0 %v287
    %v289 = vpop.xlane.xlu0 %288
    %v290 = vsel %vm265, %v145, 0.0
    %291 = vadd.xlane.f32.xlu0 %v290
    %v292 = vpop.xlane.xlu0 %291
    %v293 = vsel %vm265, %v146, 0.0
    %294 = vadd.xlane.f32.xlu0 %v293
    %v295 = vpop.xlane.xlu0 %294
    %v296 = vsel %vm265, %v147, 0.0
    %297 = vadd.xlane.f32.xlu0 %v296
    %v298 = vpop.xlane.xlu0 %297
    %v299 = vsel %vm265, %v148, 0.0
    %300 = vadd.xlane.f32.xlu0 %v299
    %v301 = vpop.xlane.xlu0 %300
    %v302 = vsel %vm265, %v149, 0.0
    %303 = vadd.xlane.f32.xlu0 %v302
    %v304 = vpop.xlane.xlu0 %303
    %v305 = vsel %vm265, %v150, 0.0
    %306 = vadd.xlane.f32.xlu0 %v305
    %v307 = vpop.xlane.xlu0 %306
    %v308 = vsel %vm265, %v151, 0.0
    %309 = vadd.xlane.f32.xlu0 %v308
    %v310 = vpop.xlane.xlu0 %309
    %v311 = vsel %vm265, %v152, 0.0
    %312 = vadd.xlane.f32.xlu0 %v311
    %v313 = vpop.xlane.xlu0 %312
    %v314 = vsel %vm265, %v153, 0.0
    %315 = vadd.xlane.f32.xlu0 %v314
    %v316 = vpop.xlane.xlu0 %315
    %v317 = vsel %vm265, %v154, 0.0
    %318 = vadd.xlane.f32.xlu0 %v317
    %v319 = vpop.xlane.xlu0 %318
    %v320 = vsel %vm265, %v155, 0.0
    %321 = vadd.xlane.f32.xlu0 %v320
    %v322 = vpop.xlane.xlu0 %321
    %v323 = vsel %vm265, %v156, 0.0
    %324 = vadd.xlane.f32.xlu0 %v323
    %v325 = vpop.xlane.xlu0 %324
    %v326 = vsel %vm265, %v157, 0.0
    %327 = vadd.xlane.f32.xlu0 %v326
    %v328 = vpop.xlane.xlu0 %327
    %v329 = vsel %vm265, %v158, 0.0
    %330 = vadd.xlane.f32.xlu0 %v329
    %v331 = vpop.xlane.xlu0 %330
    %v332 = vsel %vm265, %v159, 0.0
    %333 = vadd.xlane.f32.xlu0 %v332
    %v334 = vpop.xlane.xlu0 %333
    %v335 = vsel %vm265, %v160, 0.0
    %336 = vadd.xlane.f32.xlu0 %v335
    %v337 = vpop.xlane.xlu0 %336
    %v338 = vsel %vm265, %v161, 0.0
    %339 = vadd.xlane.f32.xlu0 %v338
    %v340 = vpop.xlane.xlu0 %339
    %v341 = vsel %vm265, %v162, 0.0
    %342 = vadd.xlane.f32.xlu0 %v341
    %v343 = vpop.xlane.xlu0 %342
    %v344 = vsel %vm265, %v163, 0.0
    %345 = vadd.xlane.f32.xlu0 %v344
    %v346 = vpop.xlane.xlu0 %345
    %v347 = vsel %vm265, %v164, 0.0
    %348 = vadd.xlane.f32.xlu0 %v347
    %v349 = vpop.xlane.xlu0 %348
    %v350 = vsel %vm265, %v165, 0.0
    %351 = vadd.xlane.f32.xlu0 %v350
    %v352 = vpop.xlane.xlu0 %351
    %v353 = vsel %vm265, %v166, 0.0
    %354 = vadd.xlane.f32.xlu0 %v353
    %v355 = vpop.xlane.xlu0 %354
    %v356 = vsel %vm265, %v167, 0.0
    %357 = vadd.xlane.f32.xlu0 %v356
    %v358 = vpop.xlane.xlu0 %357
    %v359 = vsel %vm265, %v168, 0.0
    %360 = vadd.xlane.f32.xlu0 %v359
    %v361 = vpop.xlane.xlu0 %360
    %v362 = vsel %vm265, %v169, 0.0
    %363 = vadd.xlane.f32.xlu0 %v362
    %v364 = vpop.xlane.xlu0 %363
    %v365 = vsel %vm265, %v170, 0.0
    %366 = vadd.xlane.f32.xlu0 %v365
    %v367 = vpop.xlane.xlu0 %366
    %v368 = vsel %vm265, %v171, 0.0
    %369 = vadd.xlane.f32.xlu0 %v368
    %v370 = vpop.xlane.xlu0 %369
    %v371 = vsel %vm265, %v172, 0.0
    %372 = vadd.xlane.f32.xlu0 %v371
    %v373 = vpop.xlane.xlu0 %372
    %v374 = vsel %vm265, %v173, 0.0
    %375 = vadd.xlane.f32.xlu0 %v374
    %v376 = vpop.xlane.xlu0 %375
    %v377 = vsel %vm265, %v174, 0.0
    %378 = vadd.xlane.f32.xlu0 %v377
    %v379 = vpop.xlane.xlu0 %378
    %v380 = vsel %vm265, %v175, 0.0
    %381 = vadd.xlane.f32.xlu0 %v380
    %v382 = vpop.xlane.xlu0 %381
    %v383 = vsel %vm265, %v176, 0.0
    %384 = vadd.xlane.f32.xlu0 %v383
    %v385 = vpop.xlane.xlu0 %384
    %v386 = vsel %vm265, %v177, 0.0
    %387 = vadd.xlane.f32.xlu0 %v386
    %v388 = vpop.xlane.xlu0 %387
    %v389 = vsel %vm265, %v178, 0.0
    %390 = vadd.xlane.f32.xlu0 %v389
    %v391 = vpop.xlane.xlu0 %390
    %v392 = vsel %vm265, %v179, 0.0
    %393 = vadd.xlane.f32.xlu0 %v392
    %v394 = vpop.xlane.xlu0 %393
    %v395 = vsel %vm265, %v180, 0.0
    %396 = vadd.xlane.f32.xlu0 %v395
    %v397 = vpop.xlane.xlu0 %396
    %v398 = vsel %vm265, %v181, 0.0
    %399 = vadd.xlane.f32.xlu0 %v398
    %v400 = vpop.xlane.xlu0 %399
    %v401 = vsel %vm265, %v182, 0.0
    %402 = vadd.xlane.f32.xlu0 %v401
    %v403 = vpop.xlane.xlu0 %402
    %v404 = vsel %vm265, %v183, 0.0
    %405 = vadd.xlane.f32.xlu0 %v404
    %v406 = vpop.xlane.xlu0 %405
    %v407 = vsel %vm265, %v184, 0.0
    %408 = vadd.xlane.f32.xlu0 %v407
    %v409 = vpop.xlane.xlu0 %408
    %v410 = vsel %vm265, %v185, 0.0
    %411 = vadd.xlane.f32.xlu0 %v410
    %v412 = vpop.xlane.xlu0 %411
    %v413 = vsel %vm265, %v186, 0.0
    %414 = vadd.xlane.f32.xlu0 %v413
    %v415 = vpop.xlane.xlu0 %414
    %v416 = vsel %vm265, %v187, 0.0
    %417 = vadd.xlane.f32.xlu0 %v416
    %v418 = vpop.xlane.xlu0 %417
    %v419 = vsel %vm265, %v188, 0.0
    %420 = vadd.xlane.f32.xlu0 %v419
    %v421 = vpop.xlane.xlu0 %420
    %v422 = vsel %vm265, %v189, 0.0
    %423 = vadd.xlane.f32.xlu0 %v422
    %v424 = vpop.xlane.xlu0 %423
    %v425 = vsel %vm265, %v190, 0.0
    %426 = vadd.xlane.f32.xlu0 %v425
    %v427 = vpop.xlane.xlu0 %426
    %v428 = vsel %vm265, %v191, 0.0
    %429 = vadd.xlane.f32.xlu0 %v428
    %v430 = vpop.xlane.xlu0 %429
    %v431 = vsel %vm265, %v192, 0.0
    %432 = vadd.xlane.f32.xlu0 %v431
    %v433 = vpop.xlane.xlu0 %432
    %v434 = vsel %vm265, %v193, 0.0
    %435 = vadd.xlane.f32.xlu0 %v434
    %v436 = vpop.xlane.xlu0 %435
    %v437 = vsel %vm265, %v194, 0.0
    %438 = vadd.xlane.f32.xlu0 %v437
    %v439 = vpop.xlane.xlu0 %438
    %v440 = vsel %vm265, %v195, 0.0
    %441 = vadd.xlane.f32.xlu0 %v440
    %v442 = vpop.xlane.xlu0 %441
    %v443 = vsel %vm265, %v196, 0.0
    %444 = vadd.xlane.f32.xlu0 %v443
    %v445 = vpop.xlane.xlu0 %444
    %v446 = vsel %vm265, %v197, 0.0
    %447 = vadd.xlane.f32.xlu0 %v446
    %v448 = vpop.xlane.xlu0 %447
    %v449 = vsel %vm265, %v198, 0.0
    %450 = vadd.xlane.f32.xlu0 %v449
    %v451 = vpop.xlane.xlu0 %450
    %v452 = vsel %vm265, %v199, 0.0
    %453 = vadd.xlane.f32.xlu0 %v452
    %v454 = vpop.xlane.xlu0 %453
    %v455 = vsel %vm265, %v200, 0.0
    %456 = vadd.xlane.f32.xlu0 %v455
    %v457 = vpop.xlane.xlu0 %456
    %v458 = vsel %vm265, %v201, 0.0
    %459 = vadd.xlane.f32.xlu0 %v458
    %v460 = vpop.xlane.xlu0 %459
    %v461 = vsel %vm265, %v202, 0.0
    %462 = vadd.xlane.f32.xlu0 %v461
    %v463 = vpop.xlane.xlu0 %462
    %v464 = vsel %vm265, %v203, 0.0
    %465 = vadd.xlane.f32.xlu0 %v464
    %v466 = vpop.xlane.xlu0 %465
    %v467 = vsel %vm265, %v204, 0.0
    %468 = vadd.xlane.f32.xlu0 %v467
    %v469 = vpop.xlane.xlu0 %468
    %v470 = vsel %vm265, %v205, 0.0
    %471 = vadd.xlane.f32.xlu0 %v470
    %v472 = vpop.xlane.xlu0 %471
    %v473 = vsel %vm265, %v206, 0.0
    %474 = vadd.xlane.f32.xlu0 %v473
    %v475 = vpop.xlane.xlu0 %474
    %v476 = vsel %vm265, %v207, 0.0
    %477 = vadd.xlane.f32.xlu0 %v476
    %v478 = vpop.xlane.xlu0 %477
    %v479 = vsel %vm265, %v208, 0.0
    %480 = vadd.xlane.f32.xlu0 %v479
    %v481 = vpop.xlane.xlu0 %480
    %v482 = vsel %vm265, %v209, 0.0
    %483 = vadd.xlane.f32.xlu0 %v482
    %v484 = vpop.xlane.xlu0 %483
    %v485 = vsel %vm265, %v210, 0.0
    %486 = vadd.xlane.f32.xlu0 %v485
    %v487 = vpop.xlane.xlu0 %486
    %v488 = vsel %vm265, %v211, 0.0
    %489 = vadd.xlane.f32.xlu0 %v488
    %v490 = vpop.xlane.xlu0 %489
    %v491 = vsel %vm265, %v212, 0.0
    %492 = vadd.xlane.f32.xlu0 %v491
    %v493 = vpop.xlane.xlu0 %492
    %v494 = vsel %vm265, %v213, 0.0
    %495 = vadd.xlane.f32.xlu0 %v494
    %v496 = vpop.xlane.xlu0 %495
    %v497 = vsel %vm265, %v214, 0.0
    %498 = vadd.xlane.f32.xlu0 %v497
    %v499 = vpop.xlane.xlu0 %498
    %v500 = vsel %vm265, %v215, 0.0
    %501 = vadd.xlane.f32.xlu0 %v500
    %v502 = vpop.xlane.xlu0 %501
    %v503 = vsel %vm265, %v216, 0.0
    %504 = vadd.xlane.f32.xlu0 %v503
    %v505 = vpop.xlane.xlu0 %504
    %v506 = vsel %vm265, %v217, 0.0
    %507 = vadd.xlane.f32.xlu0 %v506
    %v508 = vpop.xlane.xlu0 %507
    %v509 = vsel %vm265, %v218, 0.0
    %510 = vadd.xlane.f32.xlu0 %v509
    %v511 = vpop.xlane.xlu0 %510
    %v512 = vsel %vm265, %v219, 0.0
    %513 = vadd.xlane.f32.xlu0 %v512
    %v514 = vpop.xlane.xlu0 %513
    %v515 = vsel %vm265, %v220, 0.0
    %516 = vadd.xlane.f32.xlu0 %v515
    %v517 = vpop.xlane.xlu0 %516
    %v518 = vsel %vm265, %v221, 0.0
    %519 = vadd.xlane.f32.xlu0 %v518
    %v520 = vpop.xlane.xlu0 %519
    %v521 = vsel %vm265, %v222, 0.0
    %522 = vadd.xlane.f32.xlu0 %v521
    %v523 = vpop.xlane.xlu0 %522
    %v524 = vsel %vm265, %v223, 0.0
    %525 = vadd.xlane.f32.xlu0 %v524
    %v526 = vpop.xlane.xlu0 %525
    %v527 = vsel %vm265, %v224, 0.0
    %528 = vadd.xlane.f32.xlu0 %v527
    %v529 = vpop.xlane.xlu0 %528
    %v530 = vsel %vm265, %v225, 0.0
    %531 = vadd.xlane.f32.xlu0 %v530
    %v532 = vpop.xlane.xlu0 %531
    %v533 = vsel %vm265, %v226, 0.0
    %534 = vadd.xlane.f32.xlu0 %v533
    %v535 = vpop.xlane.xlu0 %534
    %v536 = vsel %vm265, %v227, 0.0
    %537 = vadd.xlane.f32.xlu0 %v536
    %v538 = vpop.xlane.xlu0 %537
    %v539 = vsel %vm265, %v228, 0.0
    %540 = vadd.xlane.f32.xlu0 %v539
    %v541 = vpop.xlane.xlu0 %540
    %v542 = vsel %vm265, %v229, 0.0
    %543 = vadd.xlane.f32.xlu0 %v542
    %v544 = vpop.xlane.xlu0 %543
    %v545 = vsel %vm265, %v230, 0.0
    %546 = vadd.xlane.f32.xlu0 %v545
    %v547 = vpop.xlane.xlu0 %546
    %v548 = vsel %vm265, %v231, 0.0
    %549 = vadd.xlane.f32.xlu0 %v548
    %v550 = vpop.xlane.xlu0 %549
    %v551 = vsel %vm265, %v232, 0.0
    %552 = vadd.xlane.f32.xlu0 %v551
    %v553 = vpop.xlane.xlu0 %552
    %v554 = vsel %vm265, %v233, 0.0
    %555 = vadd.xlane.f32.xlu0 %v554
    %v556 = vpop.xlane.xlu0 %555
    %v557 = vsel %vm265, %v234, 0.0
    %558 = vadd.xlane.f32.xlu0 %v557
    %v559 = vpop.xlane.xlu0 %558
    %v560 = vsel %vm265, %v235, 0.0
    %561 = vadd.xlane.f32.xlu0 %v560
    %v562 = vpop.xlane.xlu0 %561
    %v563 = vsel %vm265, %v236, 0.0
    %564 = vadd.xlane.f32.xlu0 %v563
    %v565 = vpop.xlane.xlu0 %564
    %v566 = vsel %vm265, %v237, 0.0
    %567 = vadd.xlane.f32.xlu0 %v566
    %v568 = vpop.xlane.xlu0 %567
    %v569 = vsel %vm265, %v238, 0.0
    %570 = vadd.xlane.f32.xlu0 %v569
    %v571 = vpop.xlane.xlu0 %570
    %v572 = vsel %vm265, %v239, 0.0
    %573 = vadd.xlane.f32.xlu0 %v572
    %v574 = vpop.xlane.xlu0 %573
    %v575 = vsel %vm265, %v240, 0.0
    %576 = vadd.xlane.f32.xlu0 %v575
    %v577 = vpop.xlane.xlu0 %576
    %v578 = vsel %vm265, %v241, 0.0
    %579 = vadd.xlane.f32.xlu0 %v578
    %v580 = vpop.xlane.xlu0 %579
    %v581 = vsel %vm265, %v242, 0.0
    %582 = vadd.xlane.f32.xlu0 %v581
    %v583 = vpop.xlane.xlu0 %582
    %v584 = vsel %vm265, %v243, 0.0
    %585 = vadd.xlane.f32.xlu0 %v584
    %v586 = vpop.xlane.xlu0 %585
    %v587 = vsel %vm265, %v244, 0.0
    %588 = vadd.xlane.f32.xlu0 %v587
    %v589 = vpop.xlane.xlu0 %588
    %v590 = vsel %vm265, %v245, 0.0
    %591 = vadd.xlane.f32.xlu0 %v590
    %v592 = vpop.xlane.xlu0 %591
    %v593 = vsel %vm265, %v246, 0.0
    %594 = vadd.xlane.f32.xlu0 %v593
    %v595 = vpop.xlane.xlu0 %594
    %v596 = vsel %vm265, %v247, 0.0
    %597 = vadd.xlane.f32.xlu0 %v596
    %v598 = vpop.xlane.xlu0 %597
    %v599 = vsel %vm265, %v248, 0.0
    %600 = vadd.xlane.f32.xlu0 %v599
    %v601 = vpop.xlane.xlu0 %600
    %v602 = vsel %vm265, %v249, 0.0
    %603 = vadd.xlane.f32.xlu0 %v602
    %v604 = vpop.xlane.xlu0 %603
    %v605 = vsel %vm265, %v250, 0.0
    %606 = vadd.xlane.f32.xlu0 %v605
    %v607 = vpop.xlane.xlu0 %606
    %v608 = vsel %vm265, %v251, 0.0
    %609 = vadd.xlane.f32.xlu0 %v608
    %v610 = vpop.xlane.xlu0 %609
    %v611 = vsel %vm265, %v252, 0.0
    %612 = vadd.xlane.f32.xlu0 %v611
    %v613 = vpop.xlane.xlu0 %612
    %v614 = vsel %vm265, %v253, 0.0
    %615 = vadd.xlane.f32.xlu0 %v614
    %v616 = vpop.xlane.xlu0 %615
    %v617 = vsel %vm265, %v254, 0.0
    %618 = vadd.xlane.f32.xlu0 %v617
    %v619 = vpop.xlane.xlu0 %618
    %v620 = vsel %vm265, %v255, 0.0
    %621 = vadd.xlane.f32.xlu0 %v620
    %v622 = vpop.xlane.xlu0 %621
    %v623 = vsel %vm265, %v256, 0.0
    %624 = vadd.xlane.f32.xlu0 %v623
    %v625 = vpop.xlane.xlu0 %624
    %v626 = vsel %vm265, %v257, 0.0
    %627 = vadd.xlane.f32.xlu0 %v626
    %v628 = vpop.xlane.xlu0 %627
    %v629 = vsel %vm265, %v258, 0.0
    %630 = vadd.xlane.f32.xlu0 %v629
    %v631 = vpop.xlane.xlu0 %630
    %v632 = vsel %vm265, %v259, 0.0
    %633 = vadd.xlane.f32.xlu0 %v632
    %v634 = vpop.xlane.xlu0 %633
    %v635 = vsel %vm265, %v260, 0.0
    %636 = vadd.xlane.f32.xlu0 %v635
    %v637 = vpop.xlane.xlu0 %636
    %v638 = vsel %vm265, %v261, 0.0
    %639 = vadd.xlane.f32.xlu0 %v638
    %v640 = vpop.xlane.xlu0 %639
    %v641 = vsel %vm265, %v262, 0.0
    %642 = vadd.xlane.f32.xlu0 %v641
    %v643 = vpop.xlane.xlu0 %642
    %v644 = vsel %vm265, %v263, 0.0
    %645 = vadd.xlane.f32.xlu0 %v644
    %v646 = vpop.xlane.xlu0 %645
    %v647 = vsel %vm265, %v264, 0.0
    %648 = vadd.xlane.f32.xlu0 %v647
    %v649 = vpop.xlane.xlu0 %648
    %v650 = vrsqrt.pop %v268
    %v651 = vmul.f32 %v650, %v268
    %v652 = vmul.f32 %v651, %v650
    %v653 = vmul.f32 0.5, %v652
    %v654 = vsub.f32 1.5, %v653
    %v655 = vmul.f32 %v650, %v654
    %v656 = vmul.f32 %v268, %v655
    %vm657 = vcmp.eq.f32.partialorder %v268, inf
    %v658 = vsel %vm657, %v268, %v656
    %vm659 = vcmp.eq.f32.partialorder %v268, 0.0
    %v660 = vand.u32 %v268, 2147483648
    %v661 = vsel %vm659, %v660, %v658
    %v662 = vrsqrt.pop %v271
    %v663 = vmul.f32 %v662, %v271
    %v664 = vmul.f32 %v663, %v662
    %v665 = vmul.f32 0.5, %v664
    %v666 = vsub.f32 1.5, %v665
    %v667 = vmul.f32 %v662, %v666
    %v668 = vmul.f32 %v271, %v667
    %vm669 = vcmp.eq.f32.partialorder %v271, inf
    %v670 = vsel %vm669, %v271, %v668
    %vm671 = vcmp.eq.f32.partialorder %v271, 0.0
    %v672 = vand.u32 %v271, 2147483648
    %v673 = vsel %vm671, %v672, %v670
    %v674 = vrsqrt.pop %v274
    %v675 = vmul.f32 %v674, %v274
    %v676 = vmul.f32 %v675, %v674
    %v677 = vmul.f32 0.5, %v676
    %v678 = vsub.f32 1.5, %v677
    %v679 = vmul.f32 %v674, %v678
    %v680 = vmul.f32 %v274, %v679
    %vm681 = vcmp.eq.f32.partialorder %v274, inf
    %v682 = vsel %vm681, %v274, %v680
    %vm683 = vcmp.eq.f32.partialorder %v274, 0.0
    %v684 = vand.u32 %v274, 2147483648
    %v685 = vsel %vm683, %v684, %v682
    %v686 = vrsqrt.pop %v277
    %v687 = vmul.f32 %v686, %v277
    %v688 = vmul.f32 %v687, %v686
    %v689 = vmul.f32 0.5, %v688
    %v690 = vsub.f32 1.5, %v689
    %v691 = vmul.f32 %v686, %v690
    %v692 = vmul.f32 %v277, %v691
    %vm693 = vcmp.eq.f32.partialorder %v277, inf
    %v694 = vsel %vm693, %v277, %v692
    %vm695 = vcmp.eq.f32.partialorder %v277, 0.0
    %v696 = vand.u32 %v277, 2147483648
    %v697 = vsel %vm695, %v696, %v694
    %v698 = vrsqrt.pop %v280
    %v699 = vmul.f32 %v698, %v280
    %v700 = vmul.f32 %v699, %v698
    %v701 = vmul.f32 0.5, %v700
    %v702 = vsub.f32 1.5, %v701
    %v703 = vmul.f32 %v698, %v702
    %v704 = vmul.f32 %v280, %v703
    %vm705 = vcmp.eq.f32.partialorder %v280, inf
    %v706 = vsel %vm705, %v280, %v704
    %vm707 = vcmp.eq.f32.partialorder %v280, 0.0
    %v708 = vand.u32 %v280, 2147483648
    %v709 = vsel %vm707, %v708, %v706
    %v710 = vrsqrt.pop %v283
    %v711 = vmul.f32 %v710, %v283
    %v712 = vmul.f32 %v711, %v710
    %v713 = vmul.f32 0.5, %v712
    %v714 = vsub.f32 1.5, %v713
    %v715 = vmul.f32 %v710, %v714
    %v716 = vmul.f32 %v283, %v715
    %vm717 = vcmp.eq.f32.partialorder %v283, inf
    %v718 = vsel %vm717, %v283, %v716
    %vm719 = vcmp.eq.f32.partialorder %v283, 0.0
    %v720 = vand.u32 %v283, 2147483648
    %v721 = vsel %vm719, %v720, %v718
    %v722 = vrsqrt.pop %v286
    %v723 = vmul.f32 %v722, %v286
    %v724 = vmul.f32 %v723, %v722
    %v725 = vmul.f32 0.5, %v724
    %v726 = vsub.f32 1.5, %v725
    %v727 = vmul.f32 %v722, %v726
    %v728 = vmul.f32 %v286, %v727
    %vm729 = vcmp.eq.f32.partialorder %v286, inf
    %v730 = vsel %vm729, %v286, %v728
    %vm731 = vcmp.eq.f32.partialorder %v286, 0.0
    %v732 = vand.u32 %v286, 2147483648
    %v733 = vsel %vm731, %v732, %v730
    %v734 = vrsqrt.pop %v289
    %v735 = vmul.f32 %v734, %v289
    %v736 = vmul.f32 %v735, %v734
    %v737 = vmul.f32 0.5, %v736
    %v738 = vsub.f32 1.5, %v737
    %v739 = vmul.f32 %v734, %v738
    %v740 = vmul.f32 %v289, %v739
    %vm741 = vcmp.eq.f32.partialorder %v289, inf
    %v742 = vsel %vm741, %v289, %v740
    %vm743 = vcmp.eq.f32.partialorder %v289, 0.0
    %v744 = vand.u32 %v289, 2147483648
    %v745 = vsel %vm743, %v744, %v742
    %v746 = vrsqrt.pop %v292
    %v747 = vmul.f32 %v746, %v292
    %v748 = vmul.f32 %v747, %v746
    %v749 = vmul.f32 0.5, %v748
    %v750 = vsub.f32 1.5, %v749
    %v751 = vmul.f32 %v746, %v750
    %v752 = vmul.f32 %v292, %v751
    %vm753 = vcmp.eq.f32.partialorder %v292, inf
    %v754 = vsel %vm753, %v292, %v752
    %vm755 = vcmp.eq.f32.partialorder %v292, 0.0
    %v756 = vand.u32 %v292, 2147483648
    %v757 = vsel %vm755, %v756, %v754
    %v758 = vrsqrt.pop %v295
    %v759 = vmul.f32 %v758, %v295
    %v760 = vmul.f32 %v759, %v758
    %v761 = vmul.f32 0.5, %v760
    %v762 = vsub.f32 1.5, %v761
    %v763 = vmul.f32 %v758, %v762
    %v764 = vmul.f32 %v295, %v763
    %vm765 = vcmp.eq.f32.partialorder %v295, inf
    %v766 = vsel %vm765, %v295, %v764
    %vm767 = vcmp.eq.f32.partialorder %v295, 0.0
    %v768 = vand.u32 %v295, 2147483648
    %v769 = vsel %vm767, %v768, %v766
    %v770 = vrsqrt.pop %v298
    %v771 = vmul.f32 %v770, %v298
    %v772 = vmul.f32 %v771, %v770
    %v773 = vmul.f32 0.5, %v772
    %v774 = vsub.f32 1.5, %v773
    %v775 = vmul.f32 %v770, %v774
    %v776 = vmul.f32 %v298, %v775
    %vm777 = vcmp.eq.f32.partialorder %v298, inf
    %v778 = vsel %vm777, %v298, %v776
    %vm779 = vcmp.eq.f32.partialorder %v298, 0.0
    %v780 = vand.u32 %v298, 2147483648
    %v781 = vsel %vm779, %v780, %v778
    %v782 = vrsqrt.pop %v301
    %v783 = vmul.f32 %v782, %v301
    %v784 = vmul.f32 %v783, %v782
    %v785 = vmul.f32 0.5, %v784
    %v786 = vsub.f32 1.5, %v785
    %v787 = vmul.f32 %v782, %v786
    %v788 = vmul.f32 %v301, %v787
    %vm789 = vcmp.eq.f32.partialorder %v301, inf
    %v790 = vsel %vm789, %v301, %v788
    %vm791 = vcmp.eq.f32.partialorder %v301, 0.0
    %v792 = vand.u32 %v301, 2147483648
    %v793 = vsel %vm791, %v792, %v790
    %v794 = vrsqrt.pop %v304
    %v795 = vmul.f32 %v794, %v304
    %v796 = vmul.f32 %v795, %v794
    %v797 = vmul.f32 0.5, %v796
    %v798 = vsub.f32 1.5, %v797
    %v799 = vmul.f32 %v794, %v798
    %v800 = vmul.f32 %v304, %v799
    %vm801 = vcmp.eq.f32.partialorder %v304, inf
    %v802 = vsel %vm801, %v304, %v800
    %vm803 = vcmp.eq.f32.partialorder %v304, 0.0
    %v804 = vand.u32 %v304, 2147483648
    %v805 = vsel %vm803, %v804, %v802
    %v806 = vrsqrt.pop %v307
    %v807 = vmul.f32 %v806, %v307
    %v808 = vmul.f32 %v807, %v806
    %v809 = vmul.f32 0.5, %v808
    %v810 = vsub.f32 1.5, %v809
    %v811 = vmul.f32 %v806, %v810
    %v812 = vmul.f32 %v307, %v811
    %vm813 = vcmp.eq.f32.partialorder %v307, inf
    %v814 = vsel %vm813, %v307, %v812
    %vm815 = vcmp.eq.f32.partialorder %v307, 0.0
    %v816 = vand.u32 %v307, 2147483648
    %v817 = vsel %vm815, %v816, %v814
    %v818 = vrsqrt.pop %v310
    %v819 = vmul.f32 %v818, %v310
    %v820 = vmul.f32 %v819, %v818
    %v821 = vmul.f32 0.5, %v820
    %v822 = vsub.f32 1.5, %v821
    %v823 = vmul.f32 %v818, %v822
    %v824 = vmul.f32 %v310, %v823
    %vm825 = vcmp.eq.f32.partialorder %v310, inf
    %v826 = vsel %vm825, %v310, %v824
    %vm827 = vcmp.eq.f32.partialorder %v310, 0.0
    %v828 = vand.u32 %v310, 2147483648
    %v829 = vsel %vm827, %v828, %v826
    %v830 = vrsqrt.pop %v313
    %v831 = vmul.f32 %v830, %v313
    %v832 = vmul.f32 %v831, %v830
    %v833 = vmul.f32 0.5, %v832
    %v834 = vsub.f32 1.5, %v833
    %v835 = vmul.f32 %v830, %v834
    %v836 = vmul.f32 %v313, %v835
    %vm837 = vcmp.eq.f32.partialorder %v313, inf
    %v838 = vsel %vm837, %v313, %v836
    %vm839 = vcmp.eq.f32.partialorder %v313, 0.0
    %v840 = vand.u32 %v313, 2147483648
    %v841 = vsel %vm839, %v840, %v838
    %v842 = vrsqrt.pop %v316
    %v843 = vmul.f32 %v842, %v316
    %v844 = vmul.f32 %v843, %v842
    %v845 = vmul.f32 0.5, %v844
    %v846 = vsub.f32 1.5, %v845
    %v847 = vmul.f32 %v842, %v846
    %v848 = vmul.f32 %v316, %v847
    %vm849 = vcmp.eq.f32.partialorder %v316, inf
    %v850 = vsel %vm849, %v316, %v848
    %vm851 = vcmp.eq.f32.partialorder %v316, 0.0
    %v852 = vand.u32 %v316, 2147483648
    %v853 = vsel %vm851, %v852, %v850
    %v854 = vrsqrt.pop %v319
    %v855 = vmul.f32 %v854, %v319
    %v856 = vmul.f32 %v855, %v854
    %v857 = vmul.f32 0.5, %v856
    %v858 = vsub.f32 1.5, %v857
    %v859 = vmul.f32 %v854, %v858
    %v860 = vmul.f32 %v319, %v859
    %vm861 = vcmp.eq.f32.partialorder %v319, inf
    %v862 = vsel %vm861, %v319, %v860
    %vm863 = vcmp.eq.f32.partialorder %v319, 0.0
    %v864 = vand.u32 %v319, 2147483648
    %v865 = vsel %vm863, %v864, %v862
    %v866 = vrsqrt.pop %v322
    %v867 = vmul.f32 %v866, %v322
    %v868 = vmul.f32 %v867, %v866
    %v869 = vmul.f32 0.5, %v868
    %v870 = vsub.f32 1.5, %v869
    %v871 = vmul.f32 %v866, %v870
    %v872 = vmul.f32 %v322, %v871
    %vm873 = vcmp.eq.f32.partialorder %v322, inf
    %v874 = vsel %vm873, %v322, %v872
    %vm875 = vcmp.eq.f32.partialorder %v322, 0.0
    %v876 = vand.u32 %v322, 2147483648
    %v877 = vsel %vm875, %v876, %v874
    %v878 = vrsqrt.pop %v325
    %v879 = vmul.f32 %v878, %v325
    %v880 = vmul.f32 %v879, %v878
    %v881 = vmul.f32 0.5, %v880
    %v882 = vsub.f32 1.5, %v881
    %v883 = vmul.f32 %v878, %v882
    %v884 = vmul.f32 %v325, %v883
    %vm885 = vcmp.eq.f32.partialorder %v325, inf
    %v886 = vsel %vm885, %v325, %v884
    %vm887 = vcmp.eq.f32.partialorder %v325, 0.0
    %v888 = vand.u32 %v325, 2147483648
    %v889 = vsel %vm887, %v888, %v886
    %v890 = vrsqrt.pop %v328
    %v891 = vmul.f32 %v890, %v328
    %v892 = vmul.f32 %v891, %v890
    %v893 = vmul.f32 0.5, %v892
    %v894 = vsub.f32 1.5, %v893
    %v895 = vmul.f32 %v890, %v894
    %v896 = vmul.f32 %v328, %v895
    %vm897 = vcmp.eq.f32.partialorder %v328, inf
    %v898 = vsel %vm897, %v328, %v896
    %vm899 = vcmp.eq.f32.partialorder %v328, 0.0
    %v900 = vand.u32 %v328, 2147483648
    %v901 = vsel %vm899, %v900, %v898
    %v902 = vrsqrt.pop %v331
    %v903 = vmul.f32 %v902, %v331
    %v904 = vmul.f32 %v903, %v902
    %v905 = vmul.f32 0.5, %v904
    %v906 = vsub.f32 1.5, %v905
    %v907 = vmul.f32 %v902, %v906
    %v908 = vmul.f32 %v331, %v907
    %vm909 = vcmp.eq.f32.partialorder %v331, inf
    %v910 = vsel %vm909, %v331, %v908
    %vm911 = vcmp.eq.f32.partialorder %v331, 0.0
    %v912 = vand.u32 %v331, 2147483648
    %v913 = vsel %vm911, %v912, %v910
    %v914 = vrsqrt.pop %v334
    %v915 = vmul.f32 %v914, %v334
    %v916 = vmul.f32 %v915, %v914
    %v917 = vmul.f32 0.5, %v916
    %v918 = vsub.f32 1.5, %v917
    %v919 = vmul.f32 %v914, %v918
    %v920 = vmul.f32 %v334, %v919
    %vm921 = vcmp.eq.f32.partialorder %v334, inf
    %v922 = vsel %vm921, %v334, %v920
    %vm923 = vcmp.eq.f32.partialorder %v334, 0.0
    %v924 = vand.u32 %v334, 2147483648
    %v925 = vsel %vm923, %v924, %v922
    %v926 = vrsqrt.pop %v337
    %v927 = vmul.f32 %v926, %v337
    %v928 = vmul.f32 %v927, %v926
    %v929 = vmul.f32 0.5, %v928
    %v930 = vsub.f32 1.5, %v929
    %v931 = vmul.f32 %v926, %v930
    %v932 = vmul.f32 %v337, %v931
    %vm933 = vcmp.eq.f32.partialorder %v337, inf
    %v934 = vsel %vm933, %v337, %v932
    %vm935 = vcmp.eq.f32.partialorder %v337, 0.0
    %v936 = vand.u32 %v337, 2147483648
    %v937 = vsel %vm935, %v936, %v934
    %v938 = vrsqrt.pop %v340
    %v939 = vmul.f32 %v938, %v340
    %v940 = vmul.f32 %v939, %v938
    %v941 = vmul.f32 0.5, %v940
    %v942 = vsub.f32 1.5, %v941
    %v943 = vmul.f32 %v938, %v942
    %v944 = vmul.f32 %v340, %v943
    %vm945 = vcmp.eq.f32.partialorder %v340, inf
    %v946 = vsel %vm945, %v340, %v944
    %vm947 = vcmp.eq.f32.partialorder %v340, 0.0
    %v948 = vand.u32 %v340, 2147483648
    %v949 = vsel %vm947, %v948, %v946
    %v950 = vrsqrt.pop %v343
    %v951 = vmul.f32 %v950, %v343
    %v952 = vmul.f32 %v951, %v950
    %v953 = vmul.f32 0.5, %v952
    %v954 = vsub.f32 1.5, %v953
    %v955 = vmul.f32 %v950, %v954
    %v956 = vmul.f32 %v343, %v955
    %vm957 = vcmp.eq.f32.partialorder %v343, inf
    %v958 = vsel %vm957, %v343, %v956
    %vm959 = vcmp.eq.f32.partialorder %v343, 0.0
    %v960 = vand.u32 %v343, 2147483648
    %v961 = vsel %vm959, %v960, %v958
    %v962 = vrsqrt.pop %v346
    %v963 = vmul.f32 %v962, %v346
    %v964 = vmul.f32 %v963, %v962
    %v965 = vmul.f32 0.5, %v964
    %v966 = vsub.f32 1.5, %v965
    %v967 = vmul.f32 %v962, %v966
    %v968 = vmul.f32 %v346, %v967
    %vm969 = vcmp.eq.f32.partialorder %v346, inf
    %v970 = vsel %vm969, %v346, %v968
    %vm971 = vcmp.eq.f32.partialorder %v346, 0.0
    %v972 = vand.u32 %v346, 2147483648
    %v973 = vsel %vm971, %v972, %v970
    %v974 = vrsqrt.pop %v349
    %v975 = vmul.f32 %v974, %v349
    %v976 = vmul.f32 %v975, %v974
    %v977 = vmul.f32 0.5, %v976
    %v978 = vsub.f32 1.5, %v977
    %v979 = vmul.f32 %v974, %v978
    %v980 = vmul.f32 %v349, %v979
    %vm981 = vcmp.eq.f32.partialorder %v349, inf
    %v982 = vsel %vm981, %v349, %v980
    %vm983 = vcmp.eq.f32.partialorder %v349, 0.0
    %v984 = vand.u32 %v349, 2147483648
    %v985 = vsel %vm983, %v984, %v982
    %v986 = vrsqrt.pop %v352
    %v987 = vmul.f32 %v986, %v352
    %v988 = vmul.f32 %v987, %v986
    %v989 = vmul.f32 0.5, %v988
    %v990 = vsub.f32 1.5, %v989
    %v991 = vmul.f32 %v986, %v990
    %v992 = vmul.f32 %v352, %v991
    %vm993 = vcmp.eq.f32.partialorder %v352, inf
    %v994 = vsel %vm993, %v352, %v992
    %vm995 = vcmp.eq.f32.partialorder %v352, 0.0
    %v996 = vand.u32 %v352, 2147483648
    %v997 = vsel %vm995, %v996, %v994
    %v998 = vrsqrt.pop %v355
    %v999 = vmul.f32 %v998, %v355
    %v1000 = vmul.f32 %v999, %v998
    %v1001 = vmul.f32 0.5, %v1000
    %v1002 = vsub.f32 1.5, %v1001
    %v1003 = vmul.f32 %v998, %v1002
    %v1004 = vmul.f32 %v355, %v1003
    %vm1005 = vcmp.eq.f32.partialorder %v355, inf
    %v1006 = vsel %vm1005, %v355, %v1004
    %vm1007 = vcmp.eq.f32.partialorder %v355, 0.0
    %v1008 = vand.u32 %v355, 2147483648
    %v1009 = vsel %vm1007, %v1008, %v1006
    %v1010 = vrsqrt.pop %v358
    %v1011 = vmul.f32 %v1010, %v358
    %v1012 = vmul.f32 %v1011, %v1010
    %v1013 = vmul.f32 0.5, %v1012
    %v1014 = vsub.f32 1.5, %v1013
    %v1015 = vmul.f32 %v1010, %v1014
    %v1016 = vmul.f32 %v358, %v1015
    %vm1017 = vcmp.eq.f32.partialorder %v358, inf
    %v1018 = vsel %vm1017, %v358, %v1016
    %vm1019 = vcmp.eq.f32.partialorder %v358, 0.0
    %v1020 = vand.u32 %v358, 2147483648
    %v1021 = vsel %vm1019, %v1020, %v1018
    %v1022 = vrsqrt.pop %v361
    %v1023 = vmul.f32 %v1022, %v361
    %v1024 = vmul.f32 %v1023, %v1022
    %v1025 = vmul.f32 0.5, %v1024
    %v1026 = vsub.f32 1.5, %v1025
    %v1027 = vmul.f32 %v1022, %v1026
    %v1028 = vmul.f32 %v361, %v1027
    %vm1029 = vcmp.eq.f32.partialorder %v361, inf
    %v1030 = vsel %vm1029, %v361, %v1028
    %vm1031 = vcmp.eq.f32.partialorder %v361, 0.0
    %v1032 = vand.u32 %v361, 2147483648
    %v1033 = vsel %vm1031, %v1032, %v1030
    %v1034 = vrsqrt.pop %v364
    %v1035 = vmul.f32 %v1034, %v364
    %v1036 = vmul.f32 %v1035, %v1034
    %v1037 = vmul.f32 0.5, %v1036
    %v1038 = vsub.f32 1.5, %v1037
    %v1039 = vmul.f32 %v1034, %v1038
    %v1040 = vmul.f32 %v364, %v1039
    %vm1041 = vcmp.eq.f32.partialorder %v364, inf
    %v1042 = vsel %vm1041, %v364, %v1040
    %vm1043 = vcmp.eq.f32.partialorder %v364, 0.0
    %v1044 = vand.u32 %v364, 2147483648
    %v1045 = vsel %vm1043, %v1044, %v1042
    %v1046 = vrsqrt.pop %v367
    %v1047 = vmul.f32 %v1046, %v367
    %v1048 = vmul.f32 %v1047, %v1046
    %v1049 = vmul.f32 0.5, %v1048
    %v1050 = vsub.f32 1.5, %v1049
    %v1051 = vmul.f32 %v1046, %v1050
    %v1052 = vmul.f32 %v367, %v1051
    %vm1053 = vcmp.eq.f32.partialorder %v367, inf
    %v1054 = vsel %vm1053, %v367, %v1052
    %vm1055 = vcmp.eq.f32.partialorder %v367, 0.0
    %v1056 = vand.u32 %v367, 2147483648
    %v1057 = vsel %vm1055, %v1056, %v1054
    %v1058 = vrsqrt.pop %v370
    %v1059 = vmul.f32 %v1058, %v370
    %v1060 = vmul.f32 %v1059, %v1058
    %v1061 = vmul.f32 0.5, %v1060
    %v1062 = vsub.f32 1.5, %v1061
    %v1063 = vmul.f32 %v1058, %v1062
    %v1064 = vmul.f32 %v370, %v1063
    %vm1065 = vcmp.eq.f32.partialorder %v370, inf
    %v1066 = vsel %vm1065, %v370, %v1064
    %vm1067 = vcmp.eq.f32.partialorder %v370, 0.0
    %v1068 = vand.u32 %v370, 2147483648
    %v1069 = vsel %vm1067, %v1068, %v1066
    %v1070 = vrsqrt.pop %v373
    %v1071 = vmul.f32 %v1070, %v373
    %v1072 = vmul.f32 %v1071, %v1070
    %v1073 = vmul.f32 0.5, %v1072
    %v1074 = vsub.f32 1.5, %v1073
    %v1075 = vmul.f32 %v1070, %v1074
    %v1076 = vmul.f32 %v373, %v1075
    %vm1077 = vcmp.eq.f32.partialorder %v373, inf
    %v1078 = vsel %vm1077, %v373, %v1076
    %vm1079 = vcmp.eq.f32.partialorder %v373, 0.0
    %v1080 = vand.u32 %v373, 2147483648
    %v1081 = vsel %vm1079, %v1080, %v1078
    %v1082 = vrsqrt.pop %v376
    %v1083 = vmul.f32 %v1082, %v376
    %v1084 = vmul.f32 %v1083, %v1082
    %v1085 = vmul.f32 0.5, %v1084
    %v1086 = vsub.f32 1.5, %v1085
    %v1087 = vmul.f32 %v1082, %v1086
    %v1088 = vmul.f32 %v376, %v1087
    %vm1089 = vcmp.eq.f32.partialorder %v376, inf
    %v1090 = vsel %vm1089, %v376, %v1088
    %vm1091 = vcmp.eq.f32.partialorder %v376, 0.0
    %v1092 = vand.u32 %v376, 2147483648
    %v1093 = vsel %vm1091, %v1092, %v1090
    %v1094 = vrsqrt.pop %v379
    %v1095 = vmul.f32 %v1094, %v379
    %v1096 = vmul.f32 %v1095, %v1094
    %v1097 = vmul.f32 0.5, %v1096
    %v1098 = vsub.f32 1.5, %v1097
    %v1099 = vmul.f32 %v1094, %v1098
    %v1100 = vmul.f32 %v379, %v1099
    %vm1101 = vcmp.eq.f32.partialorder %v379, inf
    %v1102 = vsel %vm1101, %v379, %v1100
    %vm1103 = vcmp.eq.f32.partialorder %v379, 0.0
    %v1104 = vand.u32 %v379, 2147483648
    %v1105 = vsel %vm1103, %v1104, %v1102
    %v1106 = vrsqrt.pop %v382
    %v1107 = vmul.f32 %v1106, %v382
    %v1108 = vmul.f32 %v1107, %v1106
    %v1109 = vmul.f32 0.5, %v1108
    %v1110 = vsub.f32 1.5, %v1109
    %v1111 = vmul.f32 %v1106, %v1110
    %v1112 = vmul.f32 %v382, %v1111
    %vm1113 = vcmp.eq.f32.partialorder %v382, inf
    %v1114 = vsel %vm1113, %v382, %v1112
    %vm1115 = vcmp.eq.f32.partialorder %v382, 0.0
    %v1116 = vand.u32 %v382, 2147483648
    %v1117 = vsel %vm1115, %v1116, %v1114
    %v1118 = vrsqrt.pop %v385
    %v1119 = vmul.f32 %v1118, %v385
    %v1120 = vmul.f32 %v1119, %v1118
    %v1121 = vmul.f32 0.5, %v1120
    %v1122 = vsub.f32 1.5, %v1121
    %v1123 = vmul.f32 %v1118, %v1122
    %v1124 = vmul.f32 %v385, %v1123
    %vm1125 = vcmp.eq.f32.partialorder %v385, inf
    %v1126 = vsel %vm1125, %v385, %v1124
    %vm1127 = vcmp.eq.f32.partialorder %v385, 0.0
    %v1128 = vand.u32 %v385, 2147483648
    %v1129 = vsel %vm1127, %v1128, %v1126
    %v1130 = vrsqrt.pop %v388
    %v1131 = vmul.f32 %v1130, %v388
    %v1132 = vmul.f32 %v1131, %v1130
    %v1133 = vmul.f32 0.5, %v1132
    %v1134 = vsub.f32 1.5, %v1133
    %v1135 = vmul.f32 %v1130, %v1134
    %v1136 = vmul.f32 %v388, %v1135
    %vm1137 = vcmp.eq.f32.partialorder %v388, inf
    %v1138 = vsel %vm1137, %v388, %v1136
    %vm1139 = vcmp.eq.f32.partialorder %v388, 0.0
    %v1140 = vand.u32 %v388, 2147483648
    %v1141 = vsel %vm1139, %v1140, %v1138
    %v1142 = vrsqrt.pop %v391
    %v1143 = vmul.f32 %v1142, %v391
    %v1144 = vmul.f32 %v1143, %v1142
    %v1145 = vmul.f32 0.5, %v1144
    %v1146 = vsub.f32 1.5, %v1145
    %v1147 = vmul.f32 %v1142, %v1146
    %v1148 = vmul.f32 %v391, %v1147
    %vm1149 = vcmp.eq.f32.partialorder %v391, inf
    %v1150 = vsel %vm1149, %v391, %v1148
    %vm1151 = vcmp.eq.f32.partialorder %v391, 0.0
    %v1152 = vand.u32 %v391, 2147483648
    %v1153 = vsel %vm1151, %v1152, %v1150
    %v1154 = vrsqrt.pop %v394
    %v1155 = vmul.f32 %v1154, %v394
    %v1156 = vmul.f32 %v1155, %v1154
    %v1157 = vmul.f32 0.5, %v1156
    %v1158 = vsub.f32 1.5, %v1157
    %v1159 = vmul.f32 %v1154, %v1158
    %v1160 = vmul.f32 %v394, %v1159
    %vm1161 = vcmp.eq.f32.partialorder %v394, inf
    %v1162 = vsel %vm1161, %v394, %v1160
    %vm1163 = vcmp.eq.f32.partialorder %v394, 0.0
    %v1164 = vand.u32 %v394, 2147483648
    %v1165 = vsel %vm1163, %v1164, %v1162
    %v1166 = vrsqrt.pop %v397
    %v1167 = vmul.f32 %v1166, %v397
    %v1168 = vmul.f32 %v1167, %v1166
    %v1169 = vmul.f32 0.5, %v1168
    %v1170 = vsub.f32 1.5, %v1169
    %v1171 = vmul.f32 %v1166, %v1170
    %v1172 = vmul.f32 %v397, %v1171
    %vm1173 = vcmp.eq.f32.partialorder %v397, inf
    %v1174 = vsel %vm1173, %v397, %v1172
    %vm1175 = vcmp.eq.f32.partialorder %v397, 0.0
    %v1176 = vand.u32 %v397, 2147483648
    %v1177 = vsel %vm1175, %v1176, %v1174
    %v1178 = vrsqrt.pop %v400
    %v1179 = vmul.f32 %v1178, %v400
    %v1180 = vmul.f32 %v1179, %v1178
    %v1181 = vmul.f32 0.5, %v1180
    %v1182 = vsub.f32 1.5, %v1181
    %v1183 = vmul.f32 %v1178, %v1182
    %v1184 = vmul.f32 %v400, %v1183
    %vm1185 = vcmp.eq.f32.partialorder %v400, inf
    %v1186 = vsel %vm1185, %v400, %v1184
    %vm1187 = vcmp.eq.f32.partialorder %v400, 0.0
    %v1188 = vand.u32 %v400, 2147483648
    %v1189 = vsel %vm1187, %v1188, %v1186
    %v1190 = vrsqrt.pop %v403
    %v1191 = vmul.f32 %v1190, %v403
    %v1192 = vmul.f32 %v1191, %v1190
    %v1193 = vmul.f32 0.5, %v1192
    %v1194 = vsub.f32 1.5, %v1193
    %v1195 = vmul.f32 %v1190, %v1194
    %v1196 = vmul.f32 %v403, %v1195
    %vm1197 = vcmp.eq.f32.partialorder %v403, inf
    %v1198 = vsel %vm1197, %v403, %v1196
    %vm1199 = vcmp.eq.f32.partialorder %v403, 0.0
    %v1200 = vand.u32 %v403, 2147483648
    %v1201 = vsel %vm1199, %v1200, %v1198
    %v1202 = vrsqrt.pop %v406
    %v1203 = vmul.f32 %v1202, %v406
    %v1204 = vmul.f32 %v1203, %v1202
    %v1205 = vmul.f32 0.5, %v1204
    %v1206 = vsub.f32 1.5, %v1205
    %v1207 = vmul.f32 %v1202, %v1206
    %v1208 = vmul.f32 %v406, %v1207
    %vm1209 = vcmp.eq.f32.partialorder %v406, inf
    %v1210 = vsel %vm1209, %v406, %v1208
    %vm1211 = vcmp.eq.f32.partialorder %v406, 0.0
    %v1212 = vand.u32 %v406, 2147483648
    %v1213 = vsel %vm1211, %v1212, %v1210
    %v1214 = vrsqrt.pop %v409
    %v1215 = vmul.f32 %v1214, %v409
    %v1216 = vmul.f32 %v1215, %v1214
    %v1217 = vmul.f32 0.5, %v1216
    %v1218 = vsub.f32 1.5, %v1217
    %v1219 = vmul.f32 %v1214, %v1218
    %v1220 = vmul.f32 %v409, %v1219
    %vm1221 = vcmp.eq.f32.partialorder %v409, inf
    %v1222 = vsel %vm1221, %v409, %v1220
    %vm1223 = vcmp.eq.f32.partialorder %v409, 0.0
    %v1224 = vand.u32 %v409, 2147483648
    %v1225 = vsel %vm1223, %v1224, %v1222
    %v1226 = vrsqrt.pop %v412
    %v1227 = vmul.f32 %v1226, %v412
    %v1228 = vmul.f32 %v1227, %v1226
    %v1229 = vmul.f32 0.5, %v1228
    %v1230 = vsub.f32 1.5, %v1229
    %v1231 = vmul.f32 %v1226, %v1230
    %v1232 = vmul.f32 %v412, %v1231
    %vm1233 = vcmp.eq.f32.partialorder %v412, inf
    %v1234 = vsel %vm1233, %v412, %v1232
    %vm1235 = vcmp.eq.f32.partialorder %v412, 0.0
    %v1236 = vand.u32 %v412, 2147483648
    %v1237 = vsel %vm1235, %v1236, %v1234
    %v1238 = vrsqrt.pop %v415
    %v1239 = vmul.f32 %v1238, %v415
    %v1240 = vmul.f32 %v1239, %v1238
    %v1241 = vmul.f32 0.5, %v1240
    %v1242 = vsub.f32 1.5, %v1241
    %v1243 = vmul.f32 %v1238, %v1242
    %v1244 = vmul.f32 %v415, %v1243
    %vm1245 = vcmp.eq.f32.partialorder %v415, inf
    %v1246 = vsel %vm1245, %v415, %v1244
    %vm1247 = vcmp.eq.f32.partialorder %v415, 0.0
    %v1248 = vand.u32 %v415, 2147483648
    %v1249 = vsel %vm1247, %v1248, %v1246
    %v1250 = vrsqrt.pop %v418
    %v1251 = vmul.f32 %v1250, %v418
    %v1252 = vmul.f32 %v1251, %v1250
    %v1253 = vmul.f32 0.5, %v1252
    %v1254 = vsub.f32 1.5, %v1253
    %v1255 = vmul.f32 %v1250, %v1254
    %v1256 = vmul.f32 %v418, %v1255
    %vm1257 = vcmp.eq.f32.partialorder %v418, inf
    %v1258 = vsel %vm1257, %v418, %v1256
    %vm1259 = vcmp.eq.f32.partialorder %v418, 0.0
    %v1260 = vand.u32 %v418, 2147483648
    %v1261 = vsel %vm1259, %v1260, %v1258
    %v1262 = vrsqrt.pop %v421
    %v1263 = vmul.f32 %v1262, %v421
    %v1264 = vmul.f32 %v1263, %v1262
    %v1265 = vmul.f32 0.5, %v1264
    %v1266 = vsub.f32 1.5, %v1265
    %v1267 = vmul.f32 %v1262, %v1266
    %v1268 = vmul.f32 %v421, %v1267
    %vm1269 = vcmp.eq.f32.partialorder %v421, inf
    %v1270 = vsel %vm1269, %v421, %v1268
    %vm1271 = vcmp.eq.f32.partialorder %v421, 0.0
    %v1272 = vand.u32 %v421, 2147483648
    %v1273 = vsel %vm1271, %v1272, %v1270
    %v1274 = vrsqrt.pop %v424
    %v1275 = vmul.f32 %v1274, %v424
    %v1276 = vmul.f32 %v1275, %v1274
    %v1277 = vmul.f32 0.5, %v1276
    %v1278 = vsub.f32 1.5, %v1277
    %v1279 = vmul.f32 %v1274, %v1278
    %v1280 = vmul.f32 %v424, %v1279
    %vm1281 = vcmp.eq.f32.partialorder %v424, inf
    %v1282 = vsel %vm1281, %v424, %v1280
    %vm1283 = vcmp.eq.f32.partialorder %v424, 0.0
    %v1284 = vand.u32 %v424, 2147483648
    %v1285 = vsel %vm1283, %v1284, %v1282
    %v1286 = vrsqrt.pop %v427
    %v1287 = vmul.f32 %v1286, %v427
    %v1288 = vmul.f32 %v1287, %v1286
    %v1289 = vmul.f32 0.5, %v1288
    %v1290 = vsub.f32 1.5, %v1289
    %v1291 = vmul.f32 %v1286, %v1290
    %v1292 = vmul.f32 %v427, %v1291
    %vm1293 = vcmp.eq.f32.partialorder %v427, inf
    %v1294 = vsel %vm1293, %v427, %v1292
    %vm1295 = vcmp.eq.f32.partialorder %v427, 0.0
    %v1296 = vand.u32 %v427, 2147483648
    %v1297 = vsel %vm1295, %v1296, %v1294
    %v1298 = vrsqrt.pop %v430
    %v1299 = vmul.f32 %v1298, %v430
    %v1300 = vmul.f32 %v1299, %v1298
    %v1301 = vmul.f32 0.5, %v1300
    %v1302 = vsub.f32 1.5, %v1301
    %v1303 = vmul.f32 %v1298, %v1302
    %v1304 = vmul.f32 %v430, %v1303
    %vm1305 = vcmp.eq.f32.partialorder %v430, inf
    %v1306 = vsel %vm1305, %v430, %v1304
    %vm1307 = vcmp.eq.f32.partialorder %v430, 0.0
    %v1308 = vand.u32 %v430, 2147483648
    %v1309 = vsel %vm1307, %v1308, %v1306
    %v1310 = vrsqrt.pop %v433
    %v1311 = vmul.f32 %v1310, %v433
    %v1312 = vmul.f32 %v1311, %v1310
    %v1313 = vmul.f32 0.5, %v1312
    %v1314 = vsub.f32 1.5, %v1313
    %v1315 = vmul.f32 %v1310, %v1314
    %v1316 = vmul.f32 %v433, %v1315
    %vm1317 = vcmp.eq.f32.partialorder %v433, inf
    %v1318 = vsel %vm1317, %v433, %v1316
    %vm1319 = vcmp.eq.f32.partialorder %v433, 0.0
    %v1320 = vand.u32 %v433, 2147483648
    %v1321 = vsel %vm1319, %v1320, %v1318
    %v1322 = vrsqrt.pop %v436
    %v1323 = vmul.f32 %v1322, %v436
    %v1324 = vmul.f32 %v1323, %v1322
    %v1325 = vmul.f32 0.5, %v1324
    %v1326 = vsub.f32 1.5, %v1325
    %v1327 = vmul.f32 %v1322, %v1326
    %v1328 = vmul.f32 %v436, %v1327
    %vm1329 = vcmp.eq.f32.partialorder %v436, inf
    %v1330 = vsel %vm1329, %v436, %v1328
    %vm1331 = vcmp.eq.f32.partialorder %v436, 0.0
    %v1332 = vand.u32 %v436, 2147483648
    %v1333 = vsel %vm1331, %v1332, %v1330
    %v1334 = vrsqrt.pop %v439
    %v1335 = vmul.f32 %v1334, %v439
    %v1336 = vmul.f32 %v1335, %v1334
    %v1337 = vmul.f32 0.5, %v1336
    %v1338 = vsub.f32 1.5, %v1337
    %v1339 = vmul.f32 %v1334, %v1338
    %v1340 = vmul.f32 %v439, %v1339
    %vm1341 = vcmp.eq.f32.partialorder %v439, inf
    %v1342 = vsel %vm1341, %v439, %v1340
    %vm1343 = vcmp.eq.f32.partialorder %v439, 0.0
    %v1344 = vand.u32 %v439, 2147483648
    %v1345 = vsel %vm1343, %v1344, %v1342
    %v1346 = vrsqrt.pop %v442
    %v1347 = vmul.f32 %v1346, %v442
    %v1348 = vmul.f32 %v1347, %v1346
    %v1349 = vmul.f32 0.5, %v1348
    %v1350 = vsub.f32 1.5, %v1349
    %v1351 = vmul.f32 %v1346, %v1350
    %v1352 = vmul.f32 %v442, %v1351
    %vm1353 = vcmp.eq.f32.partialorder %v442, inf
    %v1354 = vsel %vm1353, %v442, %v1352
    %vm1355 = vcmp.eq.f32.partialorder %v442, 0.0
    %v1356 = vand.u32 %v442, 2147483648
    %v1357 = vsel %vm1355, %v1356, %v1354
    %v1358 = vrsqrt.pop %v445
    %v1359 = vmul.f32 %v1358, %v445
    %v1360 = vmul.f32 %v1359, %v1358
    %v1361 = vmul.f32 0.5, %v1360
    %v1362 = vsub.f32 1.5, %v1361
    %v1363 = vmul.f32 %v1358, %v1362
    %v1364 = vmul.f32 %v445, %v1363
    %vm1365 = vcmp.eq.f32.partialorder %v445, inf
    %v1366 = vsel %vm1365, %v445, %v1364
    %vm1367 = vcmp.eq.f32.partialorder %v445, 0.0
    %v1368 = vand.u32 %v445, 2147483648
    %v1369 = vsel %vm1367, %v1368, %v1366
    %v1370 = vrsqrt.pop %v448
    %v1371 = vmul.f32 %v1370, %v448
    %v1372 = vmul.f32 %v1371, %v1370
    %v1373 = vmul.f32 0.5, %v1372
    %v1374 = vsub.f32 1.5, %v1373
    %v1375 = vmul.f32 %v1370, %v1374
    %v1376 = vmul.f32 %v448, %v1375
    %vm1377 = vcmp.eq.f32.partialorder %v448, inf
    %v1378 = vsel %vm1377, %v448, %v1376
    %vm1379 = vcmp.eq.f32.partialorder %v448, 0.0
    %v1380 = vand.u32 %v448, 2147483648
    %v1381 = vsel %vm1379, %v1380, %v1378
    %v1382 = vrsqrt.pop %v451
    %v1383 = vmul.f32 %v1382, %v451
    %v1384 = vmul.f32 %v1383, %v1382
    %v1385 = vmul.f32 0.5, %v1384
    %v1386 = vsub.f32 1.5, %v1385
    %v1387 = vmul.f32 %v1382, %v1386
    %v1388 = vmul.f32 %v451, %v1387
    %vm1389 = vcmp.eq.f32.partialorder %v451, inf
    %v1390 = vsel %vm1389, %v451, %v1388
    %vm1391 = vcmp.eq.f32.partialorder %v451, 0.0
    %v1392 = vand.u32 %v451, 2147483648
    %v1393 = vsel %vm1391, %v1392, %v1390
    %v1394 = vrsqrt.pop %v454
    %v1395 = vmul.f32 %v1394, %v454
    %v1396 = vmul.f32 %v1395, %v1394
    %v1397 = vmul.f32 0.5, %v1396
    %v1398 = vsub.f32 1.5, %v1397
    %v1399 = vmul.f32 %v1394, %v1398
    %v1400 = vmul.f32 %v454, %v1399
    %vm1401 = vcmp.eq.f32.partialorder %v454, inf
    %v1402 = vsel %vm1401, %v454, %v1400
    %vm1403 = vcmp.eq.f32.partialorder %v454, 0.0
    %v1404 = vand.u32 %v454, 2147483648
    %v1405 = vsel %vm1403, %v1404, %v1402
    %v1406 = vrsqrt.pop %v457
    %v1407 = vmul.f32 %v1406, %v457
    %v1408 = vmul.f32 %v1407, %v1406
    %v1409 = vmul.f32 0.5, %v1408
    %v1410 = vsub.f32 1.5, %v1409
    %v1411 = vmul.f32 %v1406, %v1410
    %v1412 = vmul.f32 %v457, %v1411
    %vm1413 = vcmp.eq.f32.partialorder %v457, inf
    %v1414 = vsel %vm1413, %v457, %v1412
    %vm1415 = vcmp.eq.f32.partialorder %v457, 0.0
    %v1416 = vand.u32 %v457, 2147483648
    %v1417 = vsel %vm1415, %v1416, %v1414
    %v1418 = vrsqrt.pop %v460
    %v1419 = vmul.f32 %v1418, %v460
    %v1420 = vmul.f32 %v1419, %v1418
    %v1421 = vmul.f32 0.5, %v1420
    %v1422 = vsub.f32 1.5, %v1421
    %v1423 = vmul.f32 %v1418, %v1422
    %v1424 = vmul.f32 %v460, %v1423
    %vm1425 = vcmp.eq.f32.partialorder %v460, inf
    %v1426 = vsel %vm1425, %v460, %v1424
    %vm1427 = vcmp.eq.f32.partialorder %v460, 0.0
    %v1428 = vand.u32 %v460, 2147483648
    %v1429 = vsel %vm1427, %v1428, %v1426
    %v1430 = vrsqrt.pop %v463
    %v1431 = vmul.f32 %v1430, %v463
    %v1432 = vmul.f32 %v1431, %v1430
    %v1433 = vmul.f32 0.5, %v1432
    %v1434 = vsub.f32 1.5, %v1433
    %v1435 = vmul.f32 %v1430, %v1434
    %v1436 = vmul.f32 %v463, %v1435
    %vm1437 = vcmp.eq.f32.partialorder %v463, inf
    %v1438 = vsel %vm1437, %v463, %v1436
    %vm1439 = vcmp.eq.f32.partialorder %v463, 0.0
    %v1440 = vand.u32 %v463, 2147483648
    %v1441 = vsel %vm1439, %v1440, %v1438
    %v1442 = vrsqrt.pop %v466
    %v1443 = vmul.f32 %v1442, %v466
    %v1444 = vmul.f32 %v1443, %v1442
    %v1445 = vmul.f32 0.5, %v1444
    %v1446 = vsub.f32 1.5, %v1445
    %v1447 = vmul.f32 %v1442, %v1446
    %v1448 = vmul.f32 %v466, %v1447
    %vm1449 = vcmp.eq.f32.partialorder %v466, inf
    %v1450 = vsel %vm1449, %v466, %v1448
    %vm1451 = vcmp.eq.f32.partialorder %v466, 0.0
    %v1452 = vand.u32 %v466, 2147483648
    %v1453 = vsel %vm1451, %v1452, %v1450
    %v1454 = vrsqrt.pop %v469
    %v1455 = vmul.f32 %v1454, %v469
    %v1456 = vmul.f32 %v1455, %v1454
    %v1457 = vmul.f32 0.5, %v1456
    %v1458 = vsub.f32 1.5, %v1457
    %v1459 = vmul.f32 %v1454, %v1458
    %v1460 = vmul.f32 %v469, %v1459
    %vm1461 = vcmp.eq.f32.partialorder %v469, inf
    %v1462 = vsel %vm1461, %v469, %v1460
    %vm1463 = vcmp.eq.f32.partialorder %v469, 0.0
    %v1464 = vand.u32 %v469, 2147483648
    %v1465 = vsel %vm1463, %v1464, %v1462
    %v1466 = vrsqrt.pop %v472
    %v1467 = vmul.f32 %v1466, %v472
    %v1468 = vmul.f32 %v1467, %v1466
    %v1469 = vmul.f32 0.5, %v1468
    %v1470 = vsub.f32 1.5, %v1469
    %v1471 = vmul.f32 %v1466, %v1470
    %v1472 = vmul.f32 %v472, %v1471
    %vm1473 = vcmp.eq.f32.partialorder %v472, inf
    %v1474 = vsel %vm1473, %v472, %v1472
    %vm1475 = vcmp.eq.f32.partialorder %v472, 0.0
    %v1476 = vand.u32 %v472, 2147483648
    %v1477 = vsel %vm1475, %v1476, %v1474
    %v1478 = vrsqrt.pop %v475
    %v1479 = vmul.f32 %v1478, %v475
    %v1480 = vmul.f32 %v1479, %v1478
    %v1481 = vmul.f32 0.5, %v1480
    %v1482 = vsub.f32 1.5, %v1481
    %v1483 = vmul.f32 %v1478, %v1482
    %v1484 = vmul.f32 %v475, %v1483
    %vm1485 = vcmp.eq.f32.partialorder %v475, inf
    %v1486 = vsel %vm1485, %v475, %v1484
    %vm1487 = vcmp.eq.f32.partialorder %v475, 0.0
    %v1488 = vand.u32 %v475, 2147483648
    %v1489 = vsel %vm1487, %v1488, %v1486
    %v1490 = vrsqrt.pop %v478
    %v1491 = vmul.f32 %v1490, %v478
    %v1492 = vmul.f32 %v1491, %v1490
    %v1493 = vmul.f32 0.5, %v1492
    %v1494 = vsub.f32 1.5, %v1493
    %v1495 = vmul.f32 %v1490, %v1494
    %v1496 = vmul.f32 %v478, %v1495
    %vm1497 = vcmp.eq.f32.partialorder %v478, inf
    %v1498 = vsel %vm1497, %v478, %v1496
    %vm1499 = vcmp.eq.f32.partialorder %v478, 0.0
    %v1500 = vand.u32 %v478, 2147483648
    %v1501 = vsel %vm1499, %v1500, %v1498
    %v1502 = vrsqrt.pop %v481
    %v1503 = vmul.f32 %v1502, %v481
    %v1504 = vmul.f32 %v1503, %v1502
    %v1505 = vmul.f32 0.5, %v1504
    %v1506 = vsub.f32 1.5, %v1505
    %v1507 = vmul.f32 %v1502, %v1506
    %v1508 = vmul.f32 %v481, %v1507
    %vm1509 = vcmp.eq.f32.partialorder %v481, inf
    %v1510 = vsel %vm1509, %v481, %v1508
    %vm1511 = vcmp.eq.f32.partialorder %v481, 0.0
    %v1512 = vand.u32 %v481, 2147483648
    %v1513 = vsel %vm1511, %v1512, %v1510
    %v1514 = vrsqrt.pop %v484
    %v1515 = vmul.f32 %v1514, %v484
    %v1516 = vmul.f32 %v1515, %v1514
    %v1517 = vmul.f32 0.5, %v1516
    %v1518 = vsub.f32 1.5, %v1517
    %v1519 = vmul.f32 %v1514, %v1518
    %v1520 = vmul.f32 %v484, %v1519
    %vm1521 = vcmp.eq.f32.partialorder %v484, inf
    %v1522 = vsel %vm1521, %v484, %v1520
    %vm1523 = vcmp.eq.f32.partialorder %v484, 0.0
    %v1524 = vand.u32 %v484, 2147483648
    %v1525 = vsel %vm1523, %v1524, %v1522
    %v1526 = vrsqrt.pop %v487
    %v1527 = vmul.f32 %v1526, %v487
    %v1528 = vmul.f32 %v1527, %v1526
    %v1529 = vmul.f32 0.5, %v1528
    %v1530 = vsub.f32 1.5, %v1529
    %v1531 = vmul.f32 %v1526, %v1530
    %v1532 = vmul.f32 %v487, %v1531
    %vm1533 = vcmp.eq.f32.partialorder %v487, inf
    %v1534 = vsel %vm1533, %v487, %v1532
    %vm1535 = vcmp.eq.f32.partialorder %v487, 0.0
    %v1536 = vand.u32 %v487, 2147483648
    %v1537 = vsel %vm1535, %v1536, %v1534
    %v1538 = vrsqrt.pop %v490
    %v1539 = vmul.f32 %v1538, %v490
    %v1540 = vmul.f32 %v1539, %v1538
    %v1541 = vmul.f32 0.5, %v1540
    %v1542 = vsub.f32 1.5, %v1541
    %v1543 = vmul.f32 %v1538, %v1542
    %v1544 = vmul.f32 %v490, %v1543
    %vm1545 = vcmp.eq.f32.partialorder %v490, inf
    %v1546 = vsel %vm1545, %v490, %v1544
    %vm1547 = vcmp.eq.f32.partialorder %v490, 0.0
    %v1548 = vand.u32 %v490, 2147483648
    %v1549 = vsel %vm1547, %v1548, %v1546
    %v1550 = vrsqrt.pop %v493
    %v1551 = vmul.f32 %v1550, %v493
    %v1552 = vmul.f32 %v1551, %v1550
    %v1553 = vmul.f32 0.5, %v1552
    %v1554 = vsub.f32 1.5, %v1553
    %v1555 = vmul.f32 %v1550, %v1554
    %v1556 = vmul.f32 %v493, %v1555
    %vm1557 = vcmp.eq.f32.partialorder %v493, inf
    %v1558 = vsel %vm1557, %v493, %v1556
    %vm1559 = vcmp.eq.f32.partialorder %v493, 0.0
    %v1560 = vand.u32 %v493, 2147483648
    %v1561 = vsel %vm1559, %v1560, %v1558
    %v1562 = vrsqrt.pop %v496
    %v1563 = vmul.f32 %v1562, %v496
    %v1564 = vmul.f32 %v1563, %v1562
    %v1565 = vmul.f32 0.5, %v1564
    %v1566 = vsub.f32 1.5, %v1565
    %v1567 = vmul.f32 %v1562, %v1566
    %v1568 = vmul.f32 %v496, %v1567
    %vm1569 = vcmp.eq.f32.partialorder %v496, inf
    %v1570 = vsel %vm1569, %v496, %v1568
    %vm1571 = vcmp.eq.f32.partialorder %v496, 0.0
    %v1572 = vand.u32 %v496, 2147483648
    %v1573 = vsel %vm1571, %v1572, %v1570
    %v1574 = vrsqrt.pop %v499
    %v1575 = vmul.f32 %v1574, %v499
    %v1576 = vmul.f32 %v1575, %v1574
    %v1577 = vmul.f32 0.5, %v1576
    %v1578 = vsub.f32 1.5, %v1577
    %v1579 = vmul.f32 %v1574, %v1578
    %v1580 = vmul.f32 %v499, %v1579
    %vm1581 = vcmp.eq.f32.partialorder %v499, inf
    %v1582 = vsel %vm1581, %v499, %v1580
    %vm1583 = vcmp.eq.f32.partialorder %v499, 0.0
    %v1584 = vand.u32 %v499, 2147483648
    %v1585 = vsel %vm1583, %v1584, %v1582
    %v1586 = vrsqrt.pop %v502
    %v1587 = vmul.f32 %v1586, %v502
    %v1588 = vmul.f32 %v1587, %v1586
    %v1589 = vmul.f32 0.5, %v1588
    %v1590 = vsub.f32 1.5, %v1589
    %v1591 = vmul.f32 %v1586, %v1590
    %v1592 = vmul.f32 %v502, %v1591
    %vm1593 = vcmp.eq.f32.partialorder %v502, inf
    %v1594 = vsel %vm1593, %v502, %v1592
    %vm1595 = vcmp.eq.f32.partialorder %v502, 0.0
    %v1596 = vand.u32 %v502, 2147483648
    %v1597 = vsel %vm1595, %v1596, %v1594
    %v1598 = vrsqrt.pop %v505
    %v1599 = vmul.f32 %v1598, %v505
    %v1600 = vmul.f32 %v1599, %v1598
    %v1601 = vmul.f32 0.5, %v1600
    %v1602 = vsub.f32 1.5, %v1601
    %v1603 = vmul.f32 %v1598, %v1602
    %v1604 = vmul.f32 %v505, %v1603
    %vm1605 = vcmp.eq.f32.partialorder %v505, inf
    %v1606 = vsel %vm1605, %v505, %v1604
    %vm1607 = vcmp.eq.f32.partialorder %v505, 0.0
    %v1608 = vand.u32 %v505, 2147483648
    %v1609 = vsel %vm1607, %v1608, %v1606
    %v1610 = vrsqrt.pop %v508
    %v1611 = vmul.f32 %v1610, %v508
    %v1612 = vmul.f32 %v1611, %v1610
    %v1613 = vmul.f32 0.5, %v1612
    %v1614 = vsub.f32 1.5, %v1613
    %v1615 = vmul.f32 %v1610, %v1614
    %v1616 = vmul.f32 %v508, %v1615
    %vm1617 = vcmp.eq.f32.partialorder %v508, inf
    %v1618 = vsel %vm1617, %v508, %v1616
    %vm1619 = vcmp.eq.f32.partialorder %v508, 0.0
    %v1620 = vand.u32 %v508, 2147483648
    %v1621 = vsel %vm1619, %v1620, %v1618
    %v1622 = vrsqrt.pop %v511
    %v1623 = vmul.f32 %v1622, %v511
    %v1624 = vmul.f32 %v1623, %v1622
    %v1625 = vmul.f32 0.5, %v1624
    %v1626 = vsub.f32 1.5, %v1625
    %v1627 = vmul.f32 %v1622, %v1626
    %v1628 = vmul.f32 %v511, %v1627
    %vm1629 = vcmp.eq.f32.partialorder %v511, inf
    %v1630 = vsel %vm1629, %v511, %v1628
    %vm1631 = vcmp.eq.f32.partialorder %v511, 0.0
    %v1632 = vand.u32 %v511, 2147483648
    %v1633 = vsel %vm1631, %v1632, %v1630
    %v1634 = vrsqrt.pop %v514
    %v1635 = vmul.f32 %v1634, %v514
    %v1636 = vmul.f32 %v1635, %v1634
    %v1637 = vmul.f32 0.5, %v1636
    %v1638 = vsub.f32 1.5, %v1637
    %v1639 = vmul.f32 %v1634, %v1638
    %v1640 = vmul.f32 %v514, %v1639
    %vm1641 = vcmp.eq.f32.partialorder %v514, inf
    %v1642 = vsel %vm1641, %v514, %v1640
    %vm1643 = vcmp.eq.f32.partialorder %v514, 0.0
    %v1644 = vand.u32 %v514, 2147483648
    %v1645 = vsel %vm1643, %v1644, %v1642
    %v1646 = vrsqrt.pop %v517
    %v1647 = vmul.f32 %v1646, %v517
    %v1648 = vmul.f32 %v1647, %v1646
    %v1649 = vmul.f32 0.5, %v1648
    %v1650 = vsub.f32 1.5, %v1649
    %v1651 = vmul.f32 %v1646, %v1650
    %v1652 = vmul.f32 %v517, %v1651
    %vm1653 = vcmp.eq.f32.partialorder %v517, inf
    %v1654 = vsel %vm1653, %v517, %v1652
    %vm1655 = vcmp.eq.f32.partialorder %v517, 0.0
    %v1656 = vand.u32 %v517, 2147483648
    %v1657 = vsel %vm1655, %v1656, %v1654
    %v1658 = vrsqrt.pop %v520
    %v1659 = vmul.f32 %v1658, %v520
    %v1660 = vmul.f32 %v1659, %v1658
    %v1661 = vmul.f32 0.5, %v1660
    %v1662 = vsub.f32 1.5, %v1661
    %v1663 = vmul.f32 %v1658, %v1662
    %v1664 = vmul.f32 %v520, %v1663
    %vm1665 = vcmp.eq.f32.partialorder %v520, inf
    %v1666 = vsel %vm1665, %v520, %v1664
    %vm1667 = vcmp.eq.f32.partialorder %v520, 0.0
    %v1668 = vand.u32 %v520, 2147483648
    %v1669 = vsel %vm1667, %v1668, %v1666
    %v1670 = vrsqrt.pop %v523
    %v1671 = vmul.f32 %v1670, %v523
    %v1672 = vmul.f32 %v1671, %v1670
    %v1673 = vmul.f32 0.5, %v1672
    %v1674 = vsub.f32 1.5, %v1673
    %v1675 = vmul.f32 %v1670, %v1674
    %v1676 = vmul.f32 %v523, %v1675
    %vm1677 = vcmp.eq.f32.partialorder %v523, inf
    %v1678 = vsel %vm1677, %v523, %v1676
    %vm1679 = vcmp.eq.f32.partialorder %v523, 0.0
    %v1680 = vand.u32 %v523, 2147483648
    %v1681 = vsel %vm1679, %v1680, %v1678
    %v1682 = vrsqrt.pop %v526
    %v1683 = vmul.f32 %v1682, %v526
    %v1684 = vmul.f32 %v1683, %v1682
    %v1685 = vmul.f32 0.5, %v1684
    %v1686 = vsub.f32 1.5, %v1685
    %v1687 = vmul.f32 %v1682, %v1686
    %v1688 = vmul.f32 %v526, %v1687
    %vm1689 = vcmp.eq.f32.partialorder %v526, inf
    %v1690 = vsel %vm1689, %v526, %v1688
    %vm1691 = vcmp.eq.f32.partialorder %v526, 0.0
    %v1692 = vand.u32 %v526, 2147483648
    %v1693 = vsel %vm1691, %v1692, %v1690
    %v1694 = vrsqrt.pop %v529
    %v1695 = vmul.f32 %v1694, %v529
    %v1696 = vmul.f32 %v1695, %v1694
    %v1697 = vmul.f32 0.5, %v1696
    %v1698 = vsub.f32 1.5, %v1697
    %v1699 = vmul.f32 %v1694, %v1698
    %v1700 = vmul.f32 %v529, %v1699
    %vm1701 = vcmp.eq.f32.partialorder %v529, inf
    %v1702 = vsel %vm1701, %v529, %v1700
    %vm1703 = vcmp.eq.f32.partialorder %v529, 0.0
    %v1704 = vand.u32 %v529, 2147483648
    %v1705 = vsel %vm1703, %v1704, %v1702
    %v1706 = vrsqrt.pop %v532
    %v1707 = vmul.f32 %v1706, %v532
    %v1708 = vmul.f32 %v1707, %v1706
    %v1709 = vmul.f32 0.5, %v1708
    %v1710 = vsub.f32 1.5, %v1709
    %v1711 = vmul.f32 %v1706, %v1710
    %v1712 = vmul.f32 %v532, %v1711
    %vm1713 = vcmp.eq.f32.partialorder %v532, inf
    %v1714 = vsel %vm1713, %v532, %v1712
    %vm1715 = vcmp.eq.f32.partialorder %v532, 0.0
    %v1716 = vand.u32 %v532, 2147483648
    %v1717 = vsel %vm1715, %v1716, %v1714
    %v1718 = vrsqrt.pop %v535
    %v1719 = vmul.f32 %v1718, %v535
    %v1720 = vmul.f32 %v1719, %v1718
    %v1721 = vmul.f32 0.5, %v1720
    %v1722 = vsub.f32 1.5, %v1721
    %v1723 = vmul.f32 %v1718, %v1722
    %v1724 = vmul.f32 %v535, %v1723
    %vm1725 = vcmp.eq.f32.partialorder %v535, inf
    %v1726 = vsel %vm1725, %v535, %v1724
    %vm1727 = vcmp.eq.f32.partialorder %v535, 0.0
    %v1728 = vand.u32 %v535, 2147483648
    %v1729 = vsel %vm1727, %v1728, %v1726
    %v1730 = vrsqrt.pop %v538
    %v1731 = vmul.f32 %v1730, %v538
    %v1732 = vmul.f32 %v1731, %v1730
    %v1733 = vmul.f32 0.5, %v1732
    %v1734 = vsub.f32 1.5, %v1733
    %v1735 = vmul.f32 %v1730, %v1734
    %v1736 = vmul.f32 %v538, %v1735
    %vm1737 = vcmp.eq.f32.partialorder %v538, inf
    %v1738 = vsel %vm1737, %v538, %v1736
    %vm1739 = vcmp.eq.f32.partialorder %v538, 0.0
    %v1740 = vand.u32 %v538, 2147483648
    %v1741 = vsel %vm1739, %v1740, %v1738
    %v1742 = vrsqrt.pop %v541
    %v1743 = vmul.f32 %v1742, %v541
    %v1744 = vmul.f32 %v1743, %v1742
    %v1745 = vmul.f32 0.5, %v1744
    %v1746 = vsub.f32 1.5, %v1745
    %v1747 = vmul.f32 %v1742, %v1746
    %v1748 = vmul.f32 %v541, %v1747
    %vm1749 = vcmp.eq.f32.partialorder %v541, inf
    %v1750 = vsel %vm1749, %v541, %v1748
    %vm1751 = vcmp.eq.f32.partialorder %v541, 0.0
    %v1752 = vand.u32 %v541, 2147483648
    %v1753 = vsel %vm1751, %v1752, %v1750
    %v1754 = vrsqrt.pop %v544
    %v1755 = vmul.f32 %v1754, %v544
    %v1756 = vmul.f32 %v1755, %v1754
    %v1757 = vmul.f32 0.5, %v1756
    %v1758 = vsub.f32 1.5, %v1757
    %v1759 = vmul.f32 %v1754, %v1758
    %v1760 = vmul.f32 %v544, %v1759
    %vm1761 = vcmp.eq.f32.partialorder %v544, inf
    %v1762 = vsel %vm1761, %v544, %v1760
    %vm1763 = vcmp.eq.f32.partialorder %v544, 0.0
    %v1764 = vand.u32 %v544, 2147483648
    %v1765 = vsel %vm1763, %v1764, %v1762
    %v1766 = vrsqrt.pop %v547
    %v1767 = vmul.f32 %v1766, %v547
    %v1768 = vmul.f32 %v1767, %v1766
    %v1769 = vmul.f32 0.5, %v1768
    %v1770 = vsub.f32 1.5, %v1769
    %v1771 = vmul.f32 %v1766, %v1770
    %v1772 = vmul.f32 %v547, %v1771
    %vm1773 = vcmp.eq.f32.partialorder %v547, inf
    %v1774 = vsel %vm1773, %v547, %v1772
    %vm1775 = vcmp.eq.f32.partialorder %v547, 0.0
    %v1776 = vand.u32 %v547, 2147483648
    %v1777 = vsel %vm1775, %v1776, %v1774
    %v1778 = vrsqrt.pop %v550
    %v1779 = vmul.f32 %v1778, %v550
    %v1780 = vmul.f32 %v1779, %v1778
    %v1781 = vmul.f32 0.5, %v1780
    %v1782 = vsub.f32 1.5, %v1781
    %v1783 = vmul.f32 %v1778, %v1782
    %v1784 = vmul.f32 %v550, %v1783
    %vm1785 = vcmp.eq.f32.partialorder %v550, inf
    %v1786 = vsel %vm1785, %v550, %v1784
    %vm1787 = vcmp.eq.f32.partialorder %v550, 0.0
    %v1788 = vand.u32 %v550, 2147483648
    %v1789 = vsel %vm1787, %v1788, %v1786
    %v1790 = vrsqrt.pop %v553
    %v1791 = vmul.f32 %v1790, %v553
    %v1792 = vmul.f32 %v1791, %v1790
    %v1793 = vmul.f32 0.5, %v1792
    %v1794 = vsub.f32 1.5, %v1793
    %v1795 = vmul.f32 %v1790, %v1794
    %v1796 = vmul.f32 %v553, %v1795
    %vm1797 = vcmp.eq.f32.partialorder %v553, inf
    %v1798 = vsel %vm1797, %v553, %v1796
    %vm1799 = vcmp.eq.f32.partialorder %v553, 0.0
    %v1800 = vand.u32 %v553, 2147483648
    %v1801 = vsel %vm1799, %v1800, %v1798
    %v1802 = vrsqrt.pop %v556
    %v1803 = vmul.f32 %v1802, %v556
    %v1804 = vmul.f32 %v1803, %v1802
    %v1805 = vmul.f32 0.5, %v1804
    %v1806 = vsub.f32 1.5, %v1805
    %v1807 = vmul.f32 %v1802, %v1806
    %v1808 = vmul.f32 %v556, %v1807
    %vm1809 = vcmp.eq.f32.partialorder %v556, inf
    %v1810 = vsel %vm1809, %v556, %v1808
    %vm1811 = vcmp.eq.f32.partialorder %v556, 0.0
    %v1812 = vand.u32 %v556, 2147483648
    %v1813 = vsel %vm1811, %v1812, %v1810
    %v1814 = vrsqrt.pop %v559
    %v1815 = vmul.f32 %v1814, %v559
    %v1816 = vmul.f32 %v1815, %v1814
    %v1817 = vmul.f32 0.5, %v1816
    %v1818 = vsub.f32 1.5, %v1817
    %v1819 = vmul.f32 %v1814, %v1818
    %v1820 = vmul.f32 %v559, %v1819
    %vm1821 = vcmp.eq.f32.partialorder %v559, inf
    %v1822 = vsel %vm1821, %v559, %v1820
    %vm1823 = vcmp.eq.f32.partialorder %v559, 0.0
    %v1824 = vand.u32 %v559, 2147483648
    %v1825 = vsel %vm1823, %v1824, %v1822
    %v1826 = vrsqrt.pop %v562
    %v1827 = vmul.f32 %v1826, %v562
    %v1828 = vmul.f32 %v1827, %v1826
    %v1829 = vmul.f32 0.5, %v1828
    %v1830 = vsub.f32 1.5, %v1829
    %v1831 = vmul.f32 %v1826, %v1830
    %v1832 = vmul.f32 %v562, %v1831
    %vm1833 = vcmp.eq.f32.partialorder %v562, inf
    %v1834 = vsel %vm1833, %v562, %v1832
    %vm1835 = vcmp.eq.f32.partialorder %v562, 0.0
    %v1836 = vand.u32 %v562, 2147483648
    %v1837 = vsel %vm1835, %v1836, %v1834
    %v1838 = vrsqrt.pop %v565
    %v1839 = vmul.f32 %v1838, %v565
    %v1840 = vmul.f32 %v1839, %v1838
    %v1841 = vmul.f32 0.5, %v1840
    %v1842 = vsub.f32 1.5, %v1841
    %v1843 = vmul.f32 %v1838, %v1842
    %v1844 = vmul.f32 %v565, %v1843
    %vm1845 = vcmp.eq.f32.partialorder %v565, inf
    %v1846 = vsel %vm1845, %v565, %v1844
    %vm1847 = vcmp.eq.f32.partialorder %v565, 0.0
    %v1848 = vand.u32 %v565, 2147483648
    %v1849 = vsel %vm1847, %v1848, %v1846
    %v1850 = vrsqrt.pop %v568
    %v1851 = vmul.f32 %v1850, %v568
    %v1852 = vmul.f32 %v1851, %v1850
    %v1853 = vmul.f32 0.5, %v1852
    %v1854 = vsub.f32 1.5, %v1853
    %v1855 = vmul.f32 %v1850, %v1854
    %v1856 = vmul.f32 %v568, %v1855
    %vm1857 = vcmp.eq.f32.partialorder %v568, inf
    %v1858 = vsel %vm1857, %v568, %v1856
    %vm1859 = vcmp.eq.f32.partialorder %v568, 0.0
    %v1860 = vand.u32 %v568, 2147483648
    %v1861 = vsel %vm1859, %v1860, %v1858
    %v1862 = vrsqrt.pop %v571
    %v1863 = vmul.f32 %v1862, %v571
    %v1864 = vmul.f32 %v1863, %v1862
    %v1865 = vmul.f32 0.5, %v1864
    %v1866 = vsub.f32 1.5, %v1865
    %v1867 = vmul.f32 %v1862, %v1866
    %v1868 = vmul.f32 %v571, %v1867
    %vm1869 = vcmp.eq.f32.partialorder %v571, inf
    %v1870 = vsel %vm1869, %v571, %v1868
    %vm1871 = vcmp.eq.f32.partialorder %v571, 0.0
    %v1872 = vand.u32 %v571, 2147483648
    %v1873 = vsel %vm1871, %v1872, %v1870
    %v1874 = vrsqrt.pop %v574
    %v1875 = vmul.f32 %v1874, %v574
    %v1876 = vmul.f32 %v1875, %v1874
    %v1877 = vmul.f32 0.5, %v1876
    %v1878 = vsub.f32 1.5, %v1877
    %v1879 = vmul.f32 %v1874, %v1878
    %v1880 = vmul.f32 %v574, %v1879
    %vm1881 = vcmp.eq.f32.partialorder %v574, inf
    %v1882 = vsel %vm1881, %v574, %v1880
    %vm1883 = vcmp.eq.f32.partialorder %v574, 0.0
    %v1884 = vand.u32 %v574, 2147483648
    %v1885 = vsel %vm1883, %v1884, %v1882
    %v1886 = vrsqrt.pop %v577
    %v1887 = vmul.f32 %v1886, %v577
    %v1888 = vmul.f32 %v1887, %v1886
    %v1889 = vmul.f32 0.5, %v1888
    %v1890 = vsub.f32 1.5, %v1889
    %v1891 = vmul.f32 %v1886, %v1890
    %v1892 = vmul.f32 %v577, %v1891
    %vm1893 = vcmp.eq.f32.partialorder %v577, inf
    %v1894 = vsel %vm1893, %v577, %v1892
    %vm1895 = vcmp.eq.f32.partialorder %v577, 0.0
    %v1896 = vand.u32 %v577, 2147483648
    %v1897 = vsel %vm1895, %v1896, %v1894
    %v1898 = vrsqrt.pop %v580
    %v1899 = vmul.f32 %v1898, %v580
    %v1900 = vmul.f32 %v1899, %v1898
    %v1901 = vmul.f32 0.5, %v1900
    %v1902 = vsub.f32 1.5, %v1901
    %v1903 = vmul.f32 %v1898, %v1902
    %v1904 = vmul.f32 %v580, %v1903
    %vm1905 = vcmp.eq.f32.partialorder %v580, inf
    %v1906 = vsel %vm1905, %v580, %v1904
    %vm1907 = vcmp.eq.f32.partialorder %v580, 0.0
    %v1908 = vand.u32 %v580, 2147483648
    %v1909 = vsel %vm1907, %v1908, %v1906
    %v1910 = vrsqrt.pop %v583
    %v1911 = vmul.f32 %v1910, %v583
    %v1912 = vmul.f32 %v1911, %v1910
    %v1913 = vmul.f32 0.5, %v1912
    %v1914 = vsub.f32 1.5, %v1913
    %v1915 = vmul.f32 %v1910, %v1914
    %v1916 = vmul.f32 %v583, %v1915
    %vm1917 = vcmp.eq.f32.partialorder %v583, inf
    %v1918 = vsel %vm1917, %v583, %v1916
    %vm1919 = vcmp.eq.f32.partialorder %v583, 0.0
    %v1920 = vand.u32 %v583, 2147483648
    %v1921 = vsel %vm1919, %v1920, %v1918
    %v1922 = vrsqrt.pop %v586
    %v1923 = vmul.f32 %v1922, %v586
    %v1924 = vmul.f32 %v1923, %v1922
    %v1925 = vmul.f32 0.5, %v1924
    %v1926 = vsub.f32 1.5, %v1925
    %v1927 = vmul.f32 %v1922, %v1926
    %v1928 = vmul.f32 %v586, %v1927
    %vm1929 = vcmp.eq.f32.partialorder %v586, inf
    %v1930 = vsel %vm1929, %v586, %v1928
    %vm1931 = vcmp.eq.f32.partialorder %v586, 0.0
    %v1932 = vand.u32 %v586, 2147483648
    %v1933 = vsel %vm1931, %v1932, %v1930
    %v1934 = vrsqrt.pop %v589
    %v1935 = vmul.f32 %v1934, %v589
    %v1936 = vmul.f32 %v1935, %v1934
    %v1937 = vmul.f32 0.5, %v1936
    %v1938 = vsub.f32 1.5, %v1937
    %v1939 = vmul.f32 %v1934, %v1938
    %v1940 = vmul.f32 %v589, %v1939
    %vm1941 = vcmp.eq.f32.partialorder %v589, inf
    %v1942 = vsel %vm1941, %v589, %v1940
    %vm1943 = vcmp.eq.f32.partialorder %v589, 0.0
    %v1944 = vand.u32 %v589, 2147483648
    %v1945 = vsel %vm1943, %v1944, %v1942
    %v1946 = vrsqrt.pop %v592
    %v1947 = vmul.f32 %v1946, %v592
    %v1948 = vmul.f32 %v1947, %v1946
    %v1949 = vmul.f32 0.5, %v1948
    %v1950 = vsub.f32 1.5, %v1949
    %v1951 = vmul.f32 %v1946, %v1950
    %v1952 = vmul.f32 %v592, %v1951
    %vm1953 = vcmp.eq.f32.partialorder %v592, inf
    %v1954 = vsel %vm1953, %v592, %v1952
    %vm1955 = vcmp.eq.f32.partialorder %v592, 0.0
    %v1956 = vand.u32 %v592, 2147483648
    %v1957 = vsel %vm1955, %v1956, %v1954
    %v1958 = vrsqrt.pop %v595
    %v1959 = vmul.f32 %v1958, %v595
    %v1960 = vmul.f32 %v1959, %v1958
    %v1961 = vmul.f32 0.5, %v1960
    %v1962 = vsub.f32 1.5, %v1961
    %v1963 = vmul.f32 %v1958, %v1962
    %v1964 = vmul.f32 %v595, %v1963
    %vm1965 = vcmp.eq.f32.partialorder %v595, inf
    %v1966 = vsel %vm1965, %v595, %v1964
    %vm1967 = vcmp.eq.f32.partialorder %v595, 0.0
    %v1968 = vand.u32 %v595, 2147483648
    %v1969 = vsel %vm1967, %v1968, %v1966
    %v1970 = vrsqrt.pop %v598
    %v1971 = vmul.f32 %v1970, %v598
    %v1972 = vmul.f32 %v1971, %v1970
    %v1973 = vmul.f32 0.5, %v1972
    %v1974 = vsub.f32 1.5, %v1973
    %v1975 = vmul.f32 %v1970, %v1974
    %v1976 = vmul.f32 %v598, %v1975
    %vm1977 = vcmp.eq.f32.partialorder %v598, inf
    %v1978 = vsel %vm1977, %v598, %v1976
    %vm1979 = vcmp.eq.f32.partialorder %v598, 0.0
    %v1980 = vand.u32 %v598, 2147483648
    %v1981 = vsel %vm1979, %v1980, %v1978
    %v1982 = vrsqrt.pop %v601
    %v1983 = vmul.f32 %v1982, %v601
    %v1984 = vmul.f32 %v1983, %v1982
    %v1985 = vmul.f32 0.5, %v1984
    %v1986 = vsub.f32 1.5, %v1985
    %v1987 = vmul.f32 %v1982, %v1986
    %v1988 = vmul.f32 %v601, %v1987
    %vm1989 = vcmp.eq.f32.partialorder %v601, inf
    %v1990 = vsel %vm1989, %v601, %v1988
    %vm1991 = vcmp.eq.f32.partialorder %v601, 0.0
    %v1992 = vand.u32 %v601, 2147483648
    %v1993 = vsel %vm1991, %v1992, %v1990
    %v1994 = vrsqrt.pop %v604
    %v1995 = vmul.f32 %v1994, %v604
    %v1996 = vmul.f32 %v1995, %v1994
    %v1997 = vmul.f32 0.5, %v1996
    %v1998 = vsub.f32 1.5, %v1997
    %v1999 = vmul.f32 %v1994, %v1998
    %v2000 = vmul.f32 %v604, %v1999
    %vm2001 = vcmp.eq.f32.partialorder %v604, inf
    %v2002 = vsel %vm2001, %v604, %v2000
    %vm2003 = vcmp.eq.f32.partialorder %v604, 0.0
    %v2004 = vand.u32 %v604, 2147483648
    %v2005 = vsel %vm2003, %v2004, %v2002
    %v2006 = vrsqrt.pop %v607
    %v2007 = vmul.f32 %v2006, %v607
    %v2008 = vmul.f32 %v2007, %v2006
    %v2009 = vmul.f32 0.5, %v2008
    %v2010 = vsub.f32 1.5, %v2009
    %v2011 = vmul.f32 %v2006, %v2010
    %v2012 = vmul.f32 %v607, %v2011
    %vm2013 = vcmp.eq.f32.partialorder %v607, inf
    %v2014 = vsel %vm2013, %v607, %v2012
    %vm2015 = vcmp.eq.f32.partialorder %v607, 0.0
    %v2016 = vand.u32 %v607, 2147483648
    %v2017 = vsel %vm2015, %v2016, %v2014
    %v2018 = vrsqrt.pop %v610
    %v2019 = vmul.f32 %v2018, %v610
    %v2020 = vmul.f32 %v2019, %v2018
    %v2021 = vmul.f32 0.5, %v2020
    %v2022 = vsub.f32 1.5, %v2021
    %v2023 = vmul.f32 %v2018, %v2022
    %v2024 = vmul.f32 %v610, %v2023
    %vm2025 = vcmp.eq.f32.partialorder %v610, inf
    %v2026 = vsel %vm2025, %v610, %v2024
    %vm2027 = vcmp.eq.f32.partialorder %v610, 0.0
    %v2028 = vand.u32 %v610, 2147483648
    %v2029 = vsel %vm2027, %v2028, %v2026
    %v2030 = vrsqrt.pop %v613
    %v2031 = vmul.f32 %v2030, %v613
    %v2032 = vmul.f32 %v2031, %v2030
    %v2033 = vmul.f32 0.5, %v2032
    %v2034 = vsub.f32 1.5, %v2033
    %v2035 = vmul.f32 %v2030, %v2034
    %v2036 = vmul.f32 %v613, %v2035
    %vm2037 = vcmp.eq.f32.partialorder %v613, inf
    %v2038 = vsel %vm2037, %v613, %v2036
    %vm2039 = vcmp.eq.f32.partialorder %v613, 0.0
    %v2040 = vand.u32 %v613, 2147483648
    %v2041 = vsel %vm2039, %v2040, %v2038
    %v2042 = vrsqrt.pop %v616
    %v2043 = vmul.f32 %v2042, %v616
    %v2044 = vmul.f32 %v2043, %v2042
    %v2045 = vmul.f32 0.5, %v2044
    %v2046 = vsub.f32 1.5, %v2045
    %v2047 = vmul.f32 %v2042, %v2046
    %v2048 = vmul.f32 %v616, %v2047
    %vm2049 = vcmp.eq.f32.partialorder %v616, inf
    %v2050 = vsel %vm2049, %v616, %v2048
    %vm2051 = vcmp.eq.f32.partialorder %v616, 0.0
    %v2052 = vand.u32 %v616, 2147483648
    %v2053 = vsel %vm2051, %v2052, %v2050
    %v2054 = vrsqrt.pop %v619
    %v2055 = vmul.f32 %v2054, %v619
    %v2056 = vmul.f32 %v2055, %v2054
    %v2057 = vmul.f32 0.5, %v2056
    %v2058 = vsub.f32 1.5, %v2057
    %v2059 = vmul.f32 %v2054, %v2058
    %v2060 = vmul.f32 %v619, %v2059
    %vm2061 = vcmp.eq.f32.partialorder %v619, inf
    %v2062 = vsel %vm2061, %v619, %v2060
    %vm2063 = vcmp.eq.f32.partialorder %v619, 0.0
    %v2064 = vand.u32 %v619, 2147483648
    %v2065 = vsel %vm2063, %v2064, %v2062
    %v2066 = vrsqrt.pop %v622
    %v2067 = vmul.f32 %v2066, %v622
    %v2068 = vmul.f32 %v2067, %v2066
    %v2069 = vmul.f32 0.5, %v2068
    %v2070 = vsub.f32 1.5, %v2069
    %v2071 = vmul.f32 %v2066, %v2070
    %v2072 = vmul.f32 %v622, %v2071
    %vm2073 = vcmp.eq.f32.partialorder %v622, inf
    %v2074 = vsel %vm2073, %v622, %v2072
    %vm2075 = vcmp.eq.f32.partialorder %v622, 0.0
    %v2076 = vand.u32 %v622, 2147483648
    %v2077 = vsel %vm2075, %v2076, %v2074
    %v2078 = vrsqrt.pop %v625
    %v2079 = vmul.f32 %v2078, %v625
    %v2080 = vmul.f32 %v2079, %v2078
    %v2081 = vmul.f32 0.5, %v2080
    %v2082 = vsub.f32 1.5, %v2081
    %v2083 = vmul.f32 %v2078, %v2082
    %v2084 = vmul.f32 %v625, %v2083
    %vm2085 = vcmp.eq.f32.partialorder %v625, inf
    %v2086 = vsel %vm2085, %v625, %v2084
    %vm2087 = vcmp.eq.f32.partialorder %v625, 0.0
    %v2088 = vand.u32 %v625, 2147483648
    %v2089 = vsel %vm2087, %v2088, %v2086
    %v2090 = vrsqrt.pop %v628
    %v2091 = vmul.f32 %v2090, %v628
    %v2092 = vmul.f32 %v2091, %v2090
    %v2093 = vmul.f32 0.5, %v2092
    %v2094 = vsub.f32 1.5, %v2093
    %v2095 = vmul.f32 %v2090, %v2094
    %v2096 = vmul.f32 %v628, %v2095
    %vm2097 = vcmp.eq.f32.partialorder %v628, inf
    %v2098 = vsel %vm2097, %v628, %v2096
    %vm2099 = vcmp.eq.f32.partialorder %v628, 0.0
    %v2100 = vand.u32 %v628, 2147483648
    %v2101 = vsel %vm2099, %v2100, %v2098
    %v2102 = vrsqrt.pop %v631
    %v2103 = vmul.f32 %v2102, %v631
    %v2104 = vmul.f32 %v2103, %v2102
    %v2105 = vmul.f32 0.5, %v2104
    %v2106 = vsub.f32 1.5, %v2105
    %v2107 = vmul.f32 %v2102, %v2106
    %v2108 = vmul.f32 %v631, %v2107
    %vm2109 = vcmp.eq.f32.partialorder %v631, inf
    %v2110 = vsel %vm2109, %v631, %v2108
    %vm2111 = vcmp.eq.f32.partialorder %v631, 0.0
    %v2112 = vand.u32 %v631, 2147483648
    %v2113 = vsel %vm2111, %v2112, %v2110
    %v2114 = vrsqrt.pop %v634
    %v2115 = vmul.f32 %v2114, %v634
    %v2116 = vmul.f32 %v2115, %v2114
    %v2117 = vmul.f32 0.5, %v2116
    %v2118 = vsub.f32 1.5, %v2117
    %v2119 = vmul.f32 %v2114, %v2118
    %v2120 = vmul.f32 %v634, %v2119
    %vm2121 = vcmp.eq.f32.partialorder %v634, inf
    %v2122 = vsel %vm2121, %v634, %v2120
    %vm2123 = vcmp.eq.f32.partialorder %v634, 0.0
    %v2124 = vand.u32 %v634, 2147483648
    %v2125 = vsel %vm2123, %v2124, %v2122
    %v2126 = vrsqrt.pop %v637
    %v2127 = vmul.f32 %v2126, %v637
    %v2128 = vmul.f32 %v2127, %v2126
    %v2129 = vmul.f32 0.5, %v2128
    %v2130 = vsub.f32 1.5, %v2129
    %v2131 = vmul.f32 %v2126, %v2130
    %v2132 = vmul.f32 %v637, %v2131
    %vm2133 = vcmp.eq.f32.partialorder %v637, inf
    %v2134 = vsel %vm2133, %v637, %v2132
    %vm2135 = vcmp.eq.f32.partialorder %v637, 0.0
    %v2136 = vand.u32 %v637, 2147483648
    %v2137 = vsel %vm2135, %v2136, %v2134
    %v2138 = vrsqrt.pop %v640
    %v2139 = vmul.f32 %v2138, %v640
    %v2140 = vmul.f32 %v2139, %v2138
    %v2141 = vmul.f32 0.5, %v2140
    %v2142 = vsub.f32 1.5, %v2141
    %v2143 = vmul.f32 %v2138, %v2142
    %v2144 = vmul.f32 %v640, %v2143
    %vm2145 = vcmp.eq.f32.partialorder %v640, inf
    %v2146 = vsel %vm2145, %v640, %v2144
    %vm2147 = vcmp.eq.f32.partialorder %v640, 0.0
    %v2148 = vand.u32 %v640, 2147483648
    %v2149 = vsel %vm2147, %v2148, %v2146
    %v2150 = vrsqrt.pop %v643
    %v2151 = vmul.f32 %v2150, %v643
    %v2152 = vmul.f32 %v2151, %v2150
    %v2153 = vmul.f32 0.5, %v2152
    %v2154 = vsub.f32 1.5, %v2153
    %v2155 = vmul.f32 %v2150, %v2154
    %v2156 = vmul.f32 %v643, %v2155
    %vm2157 = vcmp.eq.f32.partialorder %v643, inf
    %v2158 = vsel %vm2157, %v643, %v2156
    %vm2159 = vcmp.eq.f32.partialorder %v643, 0.0
    %v2160 = vand.u32 %v643, 2147483648
    %v2161 = vsel %vm2159, %v2160, %v2158
    %v2162 = vrsqrt.pop %v646
    %v2163 = vmul.f32 %v2162, %v646
    %v2164 = vmul.f32 %v2163, %v2162
    %v2165 = vmul.f32 0.5, %v2164
    %v2166 = vsub.f32 1.5, %v2165
    %v2167 = vmul.f32 %v2162, %v2166
    %v2168 = vmul.f32 %v646, %v2167
    %vm2169 = vcmp.eq.f32.partialorder %v646, inf
    %v2170 = vsel %vm2169, %v646, %v2168
    %vm2171 = vcmp.eq.f32.partialorder %v646, 0.0
    %v2172 = vand.u32 %v646, 2147483648
    %v2173 = vsel %vm2171, %v2172, %v2170
    %v2174 = vrsqrt.pop %v649
    %v2175 = vmul.f32 %v2174, %v649
    %v2176 = vmul.f32 %v2175, %v2174
    %v2177 = vmul.f32 0.5, %v2176
    %v2178 = vsub.f32 1.5, %v2177
    %v2179 = vmul.f32 %v2174, %v2178
    %v2180 = vmul.f32 %v649, %v2179
    %vm2181 = vcmp.eq.f32.partialorder %v649, inf
    %v2182 = vsel %vm2181, %v649, %v2180
    %vm2183 = vcmp.eq.f32.partialorder %v649, 0.0
    %v2184 = vand.u32 %v649, 2147483648
    %v2185 = vsel %vm2183, %v2184, %v2182
    %v2314 = vlaneseq
    %v2315 = vand.u32 %v2314, 127
    %v2316 = vperm.slane %v661, %v2315
    %v2317 = vadd.s32 %v2315, 4294967288
    %v2318 = vperm.slane %v673, %v2317
    %vm2319 = vcmask 130112
    %v2320 = vsel %vm2319, %v2318, %v2316
    %v2321 = vadd.s32 %v2315, 4294967280
    %v2322 = vperm.slane %v685, %v2321
    %vm2323 = vcmask 195712
    %v2324 = vsel %vm2323, %v2322, %v2320
    %v2325 = vadd.s32 %v2315, 4294967272
    %v2326 = vperm.slane %v697, %v2325
    %vm2327 = vcmask 261312
    %v2328 = vsel %vm2327, %v2326, %v2324
    %v2329 = vadd.s32 %v2315, 4294967264
    %v2330 = vperm.slane %v709, %v2329
    %vm2331 = vcmask 326912
    %v2332 = vsel %vm2331, %v2330, %v2328
    %v2333 = vadd.s32 %v2315, 4294967256
    %v2334 = vperm.slane %v721, %v2333
    %vm2335 = vcmask 392512
    %v2336 = vsel %vm2335, %v2334, %v2332
    %v2337 = vadd.s32 %v2315, 4294967248
    %v2338 = vperm.slane %v733, %v2337
    %vm2339 = vcmask 458112
    %v2340 = vsel %vm2339, %v2338, %v2336
    %v2341 = vadd.s32 %v2315, 4294967240
    %v2342 = vperm.slane %v745, %v2341
    %vm2343 = vcmask 523712
    %v2344 = vsel %vm2343, %v2342, %v2340
    %v2345 = vadd.s32 %v2315, 4294967232
    %v2346 = vperm.slane %v757, %v2345
    %vm2347 = vcmask 589312
    %v2348 = vsel %vm2347, %v2346, %v2344
    %v2349 = vadd.s32 %v2315, 4294967224
    %v2350 = vperm.slane %v769, %v2349
    %vm2351 = vcmask 654912
    %v2352 = vsel %vm2351, %v2350, %v2348
    %v2353 = vadd.s32 %v2315, 4294967216
    %v2354 = vperm.slane %v781, %v2353
    %vm2355 = vcmask 720512
    %v2356 = vsel %vm2355, %v2354, %v2352
    %v2357 = vadd.s32 %v2315, 4294967208
    %v2358 = vperm.slane %v793, %v2357
    %vm2359 = vcmask 786112
    %v2360 = vsel %vm2359, %v2358, %v2356
    %v2361 = vadd.s32 %v2315, 4294967200
    %v2362 = vperm.slane %v805, %v2361
    %vm2363 = vcmask 851712
    %v2364 = vsel %vm2363, %v2362, %v2360
    %v2365 = vadd.s32 %v2315, 4294967192
    %v2366 = vperm.slane %v817, %v2365
    %vm2367 = vcmask 917312
    %v2368 = vsel %vm2367, %v2366, %v2364
    %v2369 = vadd.s32 %v2315, 4294967184
    %v2370 = vperm.slane %v829, %v2369
    %vm2371 = vcmask 982912
    %v2372 = vsel %vm2371, %v2370, %v2368
    %v2373 = vadd.s32 %v2315, 4294967176
    %v2374 = vperm.slane %v841, %v2373
    %vm2375 = vcmask 1048512
    %v2376 = vsel %vm2375, %v2374, %v2372
    %v2377 = vperm.slane %v853, %v2315
    %v2378 = vperm.slane %v865, %v2317
    %v2379 = vsel %vm2319, %v2378, %v2377
    %v2380 = vperm.slane %v877, %v2321
    %v2381 = vsel %vm2323, %v2380, %v2379
    %v2382 = vperm.slane %v889, %v2325
    %v2383 = vsel %vm2327, %v2382, %v2381
    %v2384 = vperm.slane %v901, %v2329
    %v2385 = vsel %vm2331, %v2384, %v2383
    %v2386 = vperm.slane %v913, %v2333
    %v2387 = vsel %vm2335, %v2386, %v2385
    %v2388 = vperm.slane %v925, %v2337
    %v2389 = vsel %vm2339, %v2388, %v2387
    %v2390 = vperm.slane %v937, %v2341
    %v2391 = vsel %vm2343, %v2390, %v2389
    %v2392 = vperm.slane %v949, %v2345
    %v2393 = vsel %vm2347, %v2392, %v2391
    %v2394 = vperm.slane %v961, %v2349
    %v2395 = vsel %vm2351, %v2394, %v2393
    %v2396 = vperm.slane %v973, %v2353
    %v2397 = vsel %vm2355, %v2396, %v2395
    %v2398 = vperm.slane %v985, %v2357
    %v2399 = vsel %vm2359, %v2398, %v2397
    %v2400 = vperm.slane %v997, %v2361
    %v2401 = vsel %vm2363, %v2400, %v2399
    %v2402 = vperm.slane %v1009, %v2365
    %v2403 = vsel %vm2367, %v2402, %v2401
    %v2404 = vperm.slane %v1021, %v2369
    %v2405 = vsel %vm2371, %v2404, %v2403
    %v2406 = vperm.slane %v1033, %v2373
    %v2407 = vsel %vm2375, %v2406, %v2405
    %v2408 = vperm.slane %v1045, %v2315
    %v2409 = vperm.slane %v1057, %v2317
    %v2410 = vsel %vm2319, %v2409, %v2408
    %v2411 = vperm.slane %v1069, %v2321
    %v2412 = vsel %vm2323, %v2411, %v2410
    %v2413 = vperm.slane %v1081, %v2325
    %v2414 = vsel %vm2327, %v2413, %v2412
    %v2415 = vperm.slane %v1093, %v2329
    %v2416 = vsel %vm2331, %v2415, %v2414
    %v2417 = vperm.slane %v1105, %v2333
    %v2418 = vsel %vm2335, %v2417, %v2416
    %v2419 = vperm.slane %v1117, %v2337
    %v2420 = vsel %vm2339, %v2419, %v2418
    %v2421 = vperm.slane %v1129, %v2341
    %v2422 = vsel %vm2343, %v2421, %v2420
    %v2423 = vperm.slane %v1141, %v2345
    %v2424 = vsel %vm2347, %v2423, %v2422
    %v2425 = vperm.slane %v1153, %v2349
    %v2426 = vsel %vm2351, %v2425, %v2424
    %v2427 = vperm.slane %v1165, %v2353
    %v2428 = vsel %vm2355, %v2427, %v2426
    %v2429 = vperm.slane %v1177, %v2357
    %v2430 = vsel %vm2359, %v2429, %v2428
    %v2431 = vperm.slane %v1189, %v2361
    %v2432 = vsel %vm2363, %v2431, %v2430
    %v2433 = vperm.slane %v1201, %v2365
    %v2434 = vsel %vm2367, %v2433, %v2432
    %v2435 = vperm.slane %v1213, %v2369
    %v2436 = vsel %vm2371, %v2435, %v2434
    %v2437 = vperm.slane %v1225, %v2373
    %v2438 = vsel %vm2375, %v2437, %v2436
    %v2439 = vperm.slane %v1237, %v2315
    %v2440 = vperm.slane %v1249, %v2317
    %v2441 = vsel %vm2319, %v2440, %v2439
    %v2442 = vperm.slane %v1261, %v2321
    %v2443 = vsel %vm2323, %v2442, %v2441
    %v2444 = vperm.slane %v1273, %v2325
    %v2445 = vsel %vm2327, %v2444, %v2443
    %v2446 = vperm.slane %v1285, %v2329
    %v2447 = vsel %vm2331, %v2446, %v2445
    %v2448 = vperm.slane %v1297, %v2333
    %v2449 = vsel %vm2335, %v2448, %v2447
    %v2450 = vperm.slane %v1309, %v2337
    %v2451 = vsel %vm2339, %v2450, %v2449
    %v2452 = vperm.slane %v1321, %v2341
    %v2453 = vsel %vm2343, %v2452, %v2451
    %v2454 = vperm.slane %v1333, %v2345
    %v2455 = vsel %vm2347, %v2454, %v2453
    %v2456 = vperm.slane %v1345, %v2349
    %v2457 = vsel %vm2351, %v2456, %v2455
    %v2458 = vperm.slane %v1357, %v2353
    %v2459 = vsel %vm2355, %v2458, %v2457
    %v2460 = vperm.slane %v1369, %v2357
    %v2461 = vsel %vm2359, %v2460, %v2459
    %v2462 = vperm.slane %v1381, %v2361
    %v2463 = vsel %vm2363, %v2462, %v2461
    %v2464 = vperm.slane %v1393, %v2365
    %v2465 = vsel %vm2367, %v2464, %v2463
    %v2466 = vperm.slane %v1405, %v2369
    %v2467 = vsel %vm2371, %v2466, %v2465
    %v2468 = vperm.slane %v1417, %v2373
    %v2469 = vsel %vm2375, %v2468, %v2467
    %v2470 = vperm.slane %v1429, %v2315
    %v2471 = vperm.slane %v1441, %v2317
    %v2472 = vsel %vm2319, %v2471, %v2470
    %v2473 = vperm.slane %v1453, %v2321
    %v2474 = vsel %vm2323, %v2473, %v2472
    %v2475 = vperm.slane %v1465, %v2325
    %v2476 = vsel %vm2327, %v2475, %v2474
    %v2477 = vperm.slane %v1477, %v2329
    %v2478 = vsel %vm2331, %v2477, %v2476
    %v2479 = vperm.slane %v1489, %v2333
    %v2480 = vsel %vm2335, %v2479, %v2478
    %v2481 = vperm.slane %v1501, %v2337
    %v2482 = vsel %vm2339, %v2481, %v2480
    %v2483 = vperm.slane %v1513, %v2341
    %v2484 = vsel %vm2343, %v2483, %v2482
    %v2485 = vperm.slane %v1525, %v2345
    %v2486 = vsel %vm2347, %v2485, %v2484
    %v2487 = vperm.slane %v1537, %v2349
    %v2488 = vsel %vm2351, %v2487, %v2486
    %v2489 = vperm.slane %v1549, %v2353
    %v2490 = vsel %vm2355, %v2489, %v2488
    %v2491 = vperm.slane %v1561, %v2357
    %v2492 = vsel %vm2359, %v2491, %v2490
    %v2493 = vperm.slane %v1573, %v2361
    %v2494 = vsel %vm2363, %v2493, %v2492
    %v2495 = vperm.slane %v1585, %v2365
    %v2496 = vsel %vm2367, %v2495, %v2494
    %v2497 = vperm.slane %v1597, %v2369
    %v2498 = vsel %vm2371, %v2497, %v2496
    %v2499 = vperm.slane %v1609, %v2373
    %v2500 = vsel %vm2375, %v2499, %v2498
    %v2501 = vperm.slane %v1621, %v2315
    %v2502 = vperm.slane %v1633, %v2317
    %v2503 = vsel %vm2319, %v2502, %v2501
    %v2504 = vperm.slane %v1645, %v2321
    %v2505 = vsel %vm2323, %v2504, %v2503
    %v2506 = vperm.slane %v1657, %v2325
    %v2507 = vsel %vm2327, %v2506, %v2505
    %v2508 = vperm.slane %v1669, %v2329
    %v2509 = vsel %vm2331, %v2508, %v2507
    %v2510 = vperm.slane %v1681, %v2333
    %v2511 = vsel %vm2335, %v2510, %v2509
    %v2512 = vperm.slane %v1693, %v2337
    %v2513 = vsel %vm2339, %v2512, %v2511
    %v2514 = vperm.slane %v1705, %v2341
    %v2515 = vsel %vm2343, %v2514, %v2513
    %v2516 = vperm.slane %v1717, %v2345
    %v2517 = vsel %vm2347, %v2516, %v2515
    %v2518 = vperm.slane %v1729, %v2349
    %v2519 = vsel %vm2351, %v2518, %v2517
    %v2520 = vperm.slane %v1741, %v2353
    %v2521 = vsel %vm2355, %v2520, %v2519
    %v2522 = vperm.slane %v1753, %v2357
    %v2523 = vsel %vm2359, %v2522, %v2521
    %v2524 = vperm.slane %v1765, %v2361
    %v2525 = vsel %vm2363, %v2524, %v2523
    %v2526 = vperm.slane %v1777, %v2365
    %v2527 = vsel %vm2367, %v2526, %v2525
    %v2528 = vperm.slane %v1789, %v2369
    %v2529 = vsel %vm2371, %v2528, %v2527
    %v2530 = vperm.slane %v1801, %v2373
    %v2531 = vsel %vm2375, %v2530, %v2529
    %v2532 = vperm.slane %v1813, %v2315
    %v2533 = vperm.slane %v1825, %v2317
    %v2534 = vsel %vm2319, %v2533, %v2532
    %v2535 = vperm.slane %v1837, %v2321
    %v2536 = vsel %vm2323, %v2535, %v2534
    %v2537 = vperm.slane %v1849, %v2325
    %v2538 = vsel %vm2327, %v2537, %v2536
    %v2539 = vperm.slane %v1861, %v2329
    %v2540 = vsel %vm2331, %v2539, %v2538
    %v2541 = vperm.slane %v1873, %v2333
    %v2542 = vsel %vm2335, %v2541, %v2540
    %v2543 = vperm.slane %v1885, %v2337
    %v2544 = vsel %vm2339, %v2543, %v2542
    %v2545 = vperm.slane %v1897, %v2341
    %v2546 = vsel %vm2343, %v2545, %v2544
    %v2547 = vperm.slane %v1909, %v2345
    %v2548 = vsel %vm2347, %v2547, %v2546
    %v2549 = vperm.slane %v1921, %v2349
    %v2550 = vsel %vm2351, %v2549, %v2548
    %v2551 = vperm.slane %v1933, %v2353
    %v2552 = vsel %vm2355, %v2551, %v2550
    %v2553 = vperm.slane %v1945, %v2357
    %v2554 = vsel %vm2359, %v2553, %v2552
    %v2555 = vperm.slane %v1957, %v2361
    %v2556 = vsel %vm2363, %v2555, %v2554
    %v2557 = vperm.slane %v1969, %v2365
    %v2558 = vsel %vm2367, %v2557, %v2556
    %v2559 = vperm.slane %v1981, %v2369
    %v2560 = vsel %vm2371, %v2559, %v2558
    %v2561 = vperm.slane %v1993, %v2373
    %v2562 = vsel %vm2375, %v2561, %v2560
    %v2563 = vperm.slane %v2005, %v2315
    %v2564 = vperm.slane %v2017, %v2317
    %v2565 = vsel %vm2319, %v2564, %v2563
    %v2566 = vperm.slane %v2029, %v2321
    %v2567 = vsel %vm2323, %v2566, %v2565
    %v2568 = vperm.slane %v2041, %v2325
    %v2569 = vsel %vm2327, %v2568, %v2567
    %v2570 = vperm.slane %v2053, %v2329
    %v2571 = vsel %vm2331, %v2570, %v2569
    %v2572 = vperm.slane %v2065, %v2333
    %v2573 = vsel %vm2335, %v2572, %v2571
    %v2574 = vperm.slane %v2077, %v2337
    %v2575 = vsel %vm2339, %v2574, %v2573
    %v2576 = vperm.slane %v2089, %v2341
    %v2577 = vsel %vm2343, %v2576, %v2575
    %v2578 = vperm.slane %v2101, %v2345
    %v2579 = vsel %vm2347, %v2578, %v2577
    %v2580 = vperm.slane %v2113, %v2349
    %v2581 = vsel %vm2351, %v2580, %v2579
    %v2582 = vperm.slane %v2125, %v2353
    %v2583 = vsel %vm2355, %v2582, %v2581
    %v2584 = vperm.slane %v2137, %v2357
    %v2585 = vsel %vm2359, %v2584, %v2583
    %v2586 = vperm.slane %v2149, %v2361
    %v2587 = vsel %vm2363, %v2586, %v2585
    %v2588 = vperm.slane %v2161, %v2365
    %v2589 = vsel %vm2367, %v2588, %v2587
    %v2590 = vperm.slane %v2173, %v2369
    %v2591 = vsel %vm2371, %v2590, %v2589
    %v2592 = vperm.slane %v2185, %v2373
    %v2593 = vsel %vm2375, %v2592, %v2591
    %vm2594 = vcmask 1041409
    %v2595 = vsel %vm2594, %v2407, %v2376
    %vm2596 = vcmask 1042434
    %v2597 = vsel %vm2596, %v2438, %v2595
    %vm2598 = vcmask 1043459
    %v2599 = vsel %vm2598, %v2469, %v2597
    %vm2600 = vcmask 1044484
    %v2601 = vsel %vm2600, %v2500, %v2599
    %vm2602 = vcmask 1045509
    %v2603 = vsel %vm2602, %v2531, %v2601
    %vm2604 = vcmask 1046534
    %v2605 = vsel %vm2604, %v2562, %v2603
    %vm2606 = vcmask 1047559
    %v2607 = vsel %vm2606, %v2593, %v2605
    %2609 = vst [vmem:[#allocation2] sm:$0xff] %v2607
    // Predicated region
    $region6: #{tpu_custom_call.1} parent=1 // pred_check
      _
    $region7: #{tpu_custom_call.1} parent=1 // pred_check_branch
      %2611 = sbr.rel (0) target = $region9
    $region8: #{tpu_custom_call.1} parent=1 // pred_region
      %2613 = vsyncadd [#allocation3], 0
      %s2615 = sshll.u32 [#allocation2], 4
      %s2616 = int_to_ptr.vmem [resolvable:$true] %s2615
      %s2617 = sshll.u32 %s1, 4
      %s2618 = int_to_ptr.hbm [resolvable:$true] %s2617
      %2620 = dma.vmem_to_hbm [thread:$0]  %s2616, 128, %s2618, [#allocation3]
    $region9: #{tpu_custom_call.1} parent=1 // pred_fallthru
      _
    // Predicated region
    $region10: #{tpu_custom_call.1} parent=1 // pred_check
      _
    $region11: #{tpu_custom_call.1} parent=1 // pred_check_branch
      %2622 = sbr.rel (0) target = $region13
    $region12: #{tpu_custom_call.1} parent=1 // pred_region
      %2624 = dma.done [#allocation3], 128
    $region13: #{tpu_custom_call.1} parent=1 // pred_fallthru
      _
    %2625 = vsyncpa [#allocation3], 1

</llo_original>
